<compile_context>
chip_gen: v7x
topology: tpu7x:2x2x1
jax: 0.10.0
libtpu: 0.0.40
codegen_flags: <defaults>
</compile_context>

<pallas_src>
import functools

import jax
import jax.numpy as jnp
from jax.experimental import pallas as pl
from jax.experimental.pallas import tpu as pltpu


# -----------------------------------------------------------------------------
# In-kernel helpers
# -----------------------------------------------------------------------------
def _dot(a, b):
    """MXU matmul: bf16 operands (exact for 0/1 incidence), f32 accumulation."""
    return jnp.dot(a.astype(jnp.bfloat16), b.astype(jnp.bfloat16),
                   preferred_element_type=jnp.float32)


def _fused_forward_kernel(pidx, gidx, fidx,
                          param_ref, graph_ref, feat_ref, out_ref):
    """Entire GraphOppoModel forward.  pidx/gidx/fidx are static dicts
    name -> (row_offset, rows, cols) into the three packed buffers."""

    def _read(ref, entry):
        r0, rows, cols = entry
        return ref[pl.ds(r0, rows), pl.ds(0, cols)]

    P = lambda name: _read(param_ref, pidx[name])   # weights / biases (f32)
    G = lambda name: _read(graph_ref, gidx[name])   # one-hot graph structure
    F = lambda name: _read(feat_ref, fidx[name])    # input features (f32)

    # Static graph structure (one-hot incidence / membership matrices).
    G_src, G_dst, G_dst_T = G('G_src'), G('G_dst'), G('G_dst_T')
    S_edge, S_edge_T = G('S_edge'), G('S_edge_T')
    S_node, S_node_T = G('S_node'), G('S_node_T')

    def mlp2(blocks, prefix):
        # layer2(relu(layer1(concat(blocks)))) without concat: sum-of-dots.
        h = P(prefix + '.b')                          # (1, H) f32, broadcasts
        for i, x in enumerate(blocks):
            h = h + _dot(x, P(f'{prefix}.w{i}'))
        h = jnp.maximum(h, 0.0)                       # F.relu, f32 on the VPU
        return _dot(h, P(prefix + '2.w')) + P(prefix + '2.b')

    def rfm_block(tag, edge_feat, node_feat, g_repr, compute_u):
        # --- edge update (graph.apply_edges) ---
        u_e   = _dot(S_edge, g_repr)                  # per-graph u -> edges
        src_f = _dot(G_src, node_feat)                # gather src node feats
        dst_f = _dot(G_dst, node_feat)                # gather dst node feats
        new_e = mlp2([edge_feat, src_f, dst_f, u_e], f'{tag}.fc_edge')
        # --- node update (copy_edge -> sum over incoming edges -> node fn) ---
        h_msg = _dot(G_dst_T, new_e)                  # scatter-add edge feats
        u_n   = _dot(S_node, g_repr)
        new_n = mlp2([node_feat, h_msg, u_n], f'{tag}.fc_node')
        if not compute_u:                             # explicit dead-work skip
            return new_e, new_n, None
        # --- global update ---
        e_comb = _dot(S_edge_T, new_e)                # dgl.sum_edges
        n_comb = _dot(S_node_T, new_n)                # dgl.sum_nodes
        new_u = mlp2([n_comb, e_comb, g_repr], f'{tag}.fc_u')
        return new_e, new_n, new_u

    e0, n0, u0 = F('edge_feat'), F('node_feat'), F('u_obs')
    e1, n1, u1 = rfm_block('gn1', e0, n0, u0, compute_u=True)
    _, n2, _ = rfm_block('gn2', e1, n1, u1, compute_u=False)

    h = jnp.maximum(_dot(n2, P('head.w')) + P('head.b'), 0.0)
    out_ref[...] = (_dot(h, P('head2.w')) + P('head2.b')).astype(out_ref.dtype)


# -----------------------------------------------------------------------------
# Host-side packing: many small 2D arrays -> one contiguous buffer + index
# -----------------------------------------------------------------------------
def pack_arrays(named_arrays, dtype=jnp.float32, row_align=8):
    """Pack 2D arrays row-wise into one buffer; each entry at an 8-aligned row
    offset and column offset 0 (so in-kernel static slices are aligned).
    Returns (buf [R, W], {name: (row_offset, rows, cols)})."""
    width = max(int(a.shape[1]) for _, a in named_arrays)
    index, chunks, r = {}, [], 0
    for name, a in named_arrays:
        rows, cols = int(a.shape[0]), int(a.shape[1])
        index[name] = (r, rows, cols)
        pad_rows = ((rows + row_align - 1) // row_align) * row_align
        chunk = jnp.zeros((pad_rows, width), dtype).at[:rows, :cols].set(
            a.astype(dtype))
        chunks.append(chunk)
        r += pad_rows
    return jnp.concatenate(chunks, axis=0), index


# -----------------------------------------------------------------------------
# Host wrapper: ONE pallas_call, three packed VMEM inputs
# -----------------------------------------------------------------------------
def graph_oppo_forward(param_buf, pidx, graph_buf, gidx, feat_buf, fidx,
                       n_total, act_dims):
    vspec = pl.BlockSpec(memory_space=pltpu.MemorySpace.VMEM)
    kernel = functools.partial(_fused_forward_kernel, pidx, gidx, fidx)
    return pl.pallas_call(
        kernel,
        out_shape=jax.ShapeDtypeStruct((n_total, act_dims), jnp.float32),
        in_specs=[vspec, vspec, vspec],
        out_specs=vspec,
    )(param_buf, graph_buf, feat_buf)


# -----------------------------------------------------------------------------
# Deterministic synthetic parameters, stored directly in packed-entry form
# -----------------------------------------------------------------------------
def linear_entries(key, name, d_in, d_out):
    k1, k2 = jax.random.split(key)
    return [(name + '.w', jax.random.normal(k1, (d_in, d_out), jnp.float32) * 0.1),
            (name + '.b', jax.random.normal(k2, (1, d_out), jnp.float32) * 0.1)]


def split_linear_entries(key, name, d_ins, d_out):
    """nn.Linear(sum(d_ins), d_out) stored as per-input-block weight slices."""
    ks = jax.random.split(key, len(d_ins) + 1)
    out = [(f'{name}.w{i}',
            jax.random.normal(ks[i], (d, d_out), jnp.float32) * 0.1)
           for i, d in enumerate(d_ins)]
    out.append((name + '.b',
                jax.random.normal(ks[-1], (1, d_out), jnp.float32) * 0.1))
    return out


def rfm_block_entries(key, tag, edge_blocks, node_blocks, u_blocks,
                      hidden_dim, dim_out, with_u=True):
    ks = jax.random.split(key, 6)
    e = []
    e += split_linear_entries(ks[0], f'{tag}.fc_edge', edge_blocks, hidden_dim)
    e += linear_entries(ks[1], f'{tag}.fc_edge2', hidden_dim, dim_out)
    e += split_linear_entries(ks[2], f'{tag}.fc_node', node_blocks, hidden_dim)
    e += linear_entries(ks[3], f'{tag}.fc_node2', hidden_dim, dim_out)
    if with_u:
        e += split_linear_entries(ks[4], f'{tag}.fc_u', u_blocks, hidden_dim)
        e += linear_entries(ks[5], f'{tag}.fc_u2', hidden_dim, dim_out)
    return e


# -----------------------------------------------------------------------------
# Main
# -----------------------------------------------------------------------------
if __name__ == "__main__":
    # GraphOppoModel hyper-parameters (small, consistent with the module).
    dim_in_node, dim_in_edge, dim_in_u = 5, 6, 7
    hidden_dim, hidden_dim2 = 32, 32
    dim_mid, dim_out = 12, 10
    added_mid_dims, act_dims = 24, 5

    # Synthetic batched graph: B graphs, each fully connected (no self loops).
    B, nodes_per_graph = 2, 3
    N_total = B * nodes_per_graph
    src, dst, edge_graph = [], [], []
    for g in range(B):
        base = g * nodes_per_graph
        for i in range(nodes_per_graph):
            for j in range(nodes_per_graph):
                if i != j:
                    src.append(base + i)
                    dst.append(base + j)
                    edge_graph.append(g)
    E_total = len(src)
    node_graph = [g for g in range(B) for _ in range(nodes_per_graph)]

    # One-hot incidence / membership matrices; transposes precomputed ONCE.
    G_src = jax.nn.one_hot(jnp.array(src, jnp.int32), N_total, dtype=jnp.float32)
    G_dst = jax.nn.one_hot(jnp.array(dst, jnp.int32), N_total, dtype=jnp.float32)
    S_edge = jax.nn.one_hot(jnp.array(edge_graph, jnp.int32), B, dtype=jnp.float32)
    S_node = jax.nn.one_hot(jnp.array(node_graph, jnp.int32), B, dtype=jnp.float32)
    graph_buf, gidx = pack_arrays([
        ('G_src', G_src), ('G_dst', G_dst), ('G_dst_T', G_dst.T),
        ('S_edge', S_edge), ('S_edge_T', S_edge.T),
        ('S_node', S_node), ('S_node_T', S_node.T)])

    # Deterministic parameters, packed into one buffer.
    key = jax.random.PRNGKey(0)
    k_gn1, k_gn2, k_head, k_head2, k_in = jax.random.split(key, 5)
    param_entries = []
    # GNBlock = RFMBlock(dim_mid+Dn+Du, 2*Dn+Du+De, 2*dim_mid+Du, hidden, dim_mid)
    param_entries += rfm_block_entries(
        k_gn1, 'gn1',
        edge_blocks=(dim_in_edge, dim_in_node, dim_in_node, dim_in_u),
        node_blocks=(dim_in_node, dim_mid, dim_in_u),
        u_blocks=(dim_mid, dim_mid, dim_in_u),
        hidden_dim=hidden_dim, dim_out=dim_mid, with_u=True)
    # GNBlock2 = RFMBlock(dim_out+2*dim_mid, 4*dim_mid, 2*dim_out+dim_mid, h2, dim_out)
    # Its global update is never consumed by the head -> not packed, not computed.
    param_entries += rfm_block_entries(
        k_gn2, 'gn2',
        edge_blocks=(dim_mid, dim_mid, dim_mid, dim_mid),
        node_blocks=(dim_mid, dim_out, dim_mid),
        u_blocks=(dim_out, dim_out, dim_mid),
        hidden_dim=hidden_dim2, dim_out=dim_out, with_u=False)
    param_entries += linear_entries(k_head, 'head', dim_out, added_mid_dims)
    param_entries += linear_entries(k_head2, 'head2', added_mid_dims, act_dims)
    param_buf, pidx = pack_arrays(param_entries)

    # Deterministic example inputs, packed into one buffer.
    ks = jax.random.split(k_in, 3)
    edge_feat = jax.random.normal(ks[0], (E_total, dim_in_edge), jnp.float32)
    node_feat = jax.random.normal(ks[1], (N_total, dim_in_node), jnp.float32)
    u_obs = jax.random.normal(ks[2], (B, dim_in_u), jnp.float32)
    feat_buf, fidx = pack_arrays([
        ('edge_feat', edge_feat), ('node_feat', node_feat), ('u_obs', u_obs)])

    out = graph_oppo_forward(param_buf, pidx, graph_buf, gidx,
                             feat_buf, fidx, N_total, act_dims)
    jax.block_until_ready(out)
    assert out.shape == (N_total, act_dims)
    assert bool(jnp.all(jnp.isfinite(out)))
    print("KERNEL_OK")
</pallas_src>

<mosaic_0001>
module attributes {stable_mosaic.version = 11 : i64} {
  func.func @_fused_forward_kernel(%arg0: memref<512x32xf32, #tpu.memory_space<vmem>>, %arg1: memref<80x12xf32, #tpu.memory_space<vmem>>, %arg2: memref<32x7xf32, #tpu.memory_space<vmem>>, %arg3: memref<6x5xf32, #tpu.memory_space<vmem>>) attributes {dimension_semantics = [], scalar_prefetch = 0 : i64, scratch_operands = 0 : i64, tpu.core_type = #tpu.core_type<tc>} {
    %c0 = arith.constant 0 : index
    %c0_0 = arith.constant 0 : index
    %0 = vector.load %arg1[%c0, %c0_0] : memref<80x12xf32, #tpu.memory_space<vmem>>, vector<12x6xf32>
    %c16 = arith.constant 16 : index
    %c0_1 = arith.constant 0 : index
    %1 = vector.load %arg1[%c16, %c0_1] : memref<80x12xf32, #tpu.memory_space<vmem>>, vector<12x6xf32>
    %c32 = arith.constant 32 : index
    %c0_2 = arith.constant 0 : index
    %2 = vector.load %arg1[%c32, %c0_2] : memref<80x12xf32, #tpu.memory_space<vmem>>, vector<6x12xf32>
    %c40 = arith.constant 40 : index
    %c0_3 = arith.constant 0 : index
    %3 = vector.load %arg1[%c40, %c0_3] : memref<80x12xf32, #tpu.memory_space<vmem>>, vector<12x2xf32>
    %c56 = arith.constant 56 : index
    %c0_4 = arith.constant 0 : index
    %4 = vector.load %arg1[%c56, %c0_4] : memref<80x12xf32, #tpu.memory_space<vmem>>, vector<2x12xf32>
    %c64 = arith.constant 64 : index
    %c0_5 = arith.constant 0 : index
    %5 = vector.load %arg1[%c64, %c0_5] : memref<80x12xf32, #tpu.memory_space<vmem>>, vector<6x2xf32>
    %c72 = arith.constant 72 : index
    %c0_6 = arith.constant 0 : index
    %6 = vector.load %arg1[%c72, %c0_6] : memref<80x12xf32, #tpu.memory_space<vmem>>, vector<2x6xf32>
    %c0_7 = arith.constant 0 : index
    %c0_8 = arith.constant 0 : index
    %7 = vector.load %arg2[%c0_7, %c0_8] : memref<32x7xf32, #tpu.memory_space<vmem>>, vector<12x6xf32>
    %c16_9 = arith.constant 16 : index
    %c0_10 = arith.constant 0 : index
    %8 = vector.load %arg2[%c16_9, %c0_10] : memref<32x7xf32, #tpu.memory_space<vmem>>, vector<6x5xf32>
    %c24 = arith.constant 24 : index
    %c0_11 = arith.constant 0 : index
    %9 = vector.load %arg2[%c24, %c0_11] : memref<32x7xf32, #tpu.memory_space<vmem>>, vector<2x7xf32>
    %10 = arith.truncf %3 : vector<12x2xf32> to vector<12x2xbf16>
    %11 = arith.truncf %9 : vector<2x7xf32> to vector<2x7xbf16>
    %cst = arith.constant dense<0.000000e+00> : vector<12x7xf32>
    %12 = tpu.matmul %10, %11, %cst {dimension_numbers = #tpu.dot_dimension_numbers<[1], [0], [0], [1], [0, 0, 1, 1], [], []>} : vector<12x2xbf16>, vector<2x7xbf16>, vector<12x7xf32> -> vector<12x7xf32>
    %13 = arith.truncf %0 : vector<12x6xf32> to vector<12x6xbf16>
    %14 = arith.truncf %8 : vector<6x5xf32> to vector<6x5xbf16>
    %cst_12 = arith.constant dense<0.000000e+00> : vector<12x5xf32>
    %15 = tpu.matmul %13, %14, %cst_12 {dimension_numbers = #tpu.dot_dimension_numbers<[1], [0], [0], [1], [0, 0, 1, 1], [], []>} : vector<12x6xbf16>, vector<6x5xbf16>, vector<12x5xf32> -> vector<12x5xf32>
    %16 = arith.truncf %1 : vector<12x6xf32> to vector<12x6xbf16>
    %17 = arith.truncf %8 : vector<6x5xf32> to vector<6x5xbf16>
    %cst_13 = arith.constant dense<0.000000e+00> : vector<12x5xf32>
    %18 = tpu.matmul %16, %17, %cst_13 {dimension_numbers = #tpu.dot_dimension_numbers<[1], [0], [0], [1], [0, 0, 1, 1], [], []>} : vector<12x6xbf16>, vector<6x5xbf16>, vector<12x5xf32> -> vector<12x5xf32>
    %c32_14 = arith.constant 32 : index
    %c0_15 = arith.constant 0 : index
    %19 = vector.load %arg0[%c32_14, %c0_15] : memref<512x32xf32, #tpu.memory_space<vmem>>, vector<1x32xf32>
    %c0_16 = arith.constant 0 : index
    %c0_17 = arith.constant 0 : index
    %20 = vector.load %arg0[%c0_16, %c0_17] : memref<512x32xf32, #tpu.memory_space<vmem>>, vector<6x32xf32>
    %21 = arith.truncf %7 : vector<12x6xf32> to vector<12x6xbf16>
    %22 = arith.truncf %20 : vector<6x32xf32> to vector<6x32xbf16>
    %cst_18 = arith.constant dense<0.000000e+00> : vector<12x32xf32>
    %23 = tpu.matmul %21, %22, %cst_18 {dimension_numbers = #tpu.dot_dimension_numbers<[1], [0], [0], [1], [0, 0, 1, 1], [], []>} : vector<12x6xbf16>, vector<6x32xbf16>, vector<12x32xf32> -> vector<12x32xf32>
    %24 = vector.broadcast %19 : vector<1x32xf32> to vector<12x32xf32>
    %25 = arith.addf %24, %23 : vector<12x32xf32>
    %c8 = arith.constant 8 : index
    %c0_19 = arith.constant 0 : index
    %26 = vector.load %arg0[%c8, %c0_19] : memref<512x32xf32, #tpu.memory_space<vmem>>, vector<5x32xf32>
    %27 = arith.truncf %15 : vector<12x5xf32> to vector<12x5xbf16>
    %28 = arith.truncf %26 : vector<5x32xf32> to vector<5x32xbf16>
    %cst_20 = arith.constant dense<0.000000e+00> : vector<12x32xf32>
    %29 = tpu.matmul %27, %28, %cst_20 {dimension_numbers = #tpu.dot_dimension_numbers<[1], [0], [0], [1], [0, 0, 1, 1], [], []>} : vector<12x5xbf16>, vector<5x32xbf16>, vector<12x32xf32> -> vector<12x32xf32>
    %30 = arith.addf %25, %29 : vector<12x32xf32>
    %c16_21 = arith.constant 16 : index
    %c0_22 = arith.constant 0 : index
    %31 = vector.load %arg0[%c16_21, %c0_22] : memref<512x32xf32, #tpu.memory_space<vmem>>, vector<5x32xf32>
    %32 = arith.truncf %18 : vector<12x5xf32> to vector<12x5xbf16>
    %33 = arith.truncf %31 : vector<5x32xf32> to vector<5x32xbf16>
    %cst_23 = arith.constant dense<0.000000e+00> : vector<12x32xf32>
    %34 = tpu.matmul %32, %33, %cst_23 {dimension_numbers = #tpu.dot_dimension_numbers<[1], [0], [0], [1], [0, 0, 1, 1], [], []>} : vector<12x5xbf16>, vector<5x32xbf16>, vector<12x32xf32> -> vector<12x32xf32>
    %35 = arith.addf %30, %34 : vector<12x32xf32>
    %c24_24 = arith.constant 24 : index
    %c0_25 = arith.constant 0 : index
    %36 = vector.load %arg0[%c24_24, %c0_25] : memref<512x32xf32, #tpu.memory_space<vmem>>, vector<7x32xf32>
    %37 = arith.truncf %12 : vector<12x7xf32> to vector<12x7xbf16>
    %38 = arith.truncf %36 : vector<7x32xf32> to vector<7x32xbf16>
    %cst_26 = arith.constant dense<0.000000e+00> : vector<12x32xf32>
    %39 = tpu.matmul %37, %38, %cst_26 {dimension_numbers = #tpu.dot_dimension_numbers<[1], [0], [0], [1], [0, 0, 1, 1], [], []>} : vector<12x7xbf16>, vector<7x32xbf16>, vector<12x32xf32> -> vector<12x32xf32>
    %40 = arith.addf %35, %39 : vector<12x32xf32>
    %cst_27 = arith.constant 0.000000e+00 : f32
    %41 = vector.broadcast %cst_27 : f32 to vector<12x32xf32>
    %42 = arith.maximumf %40, %41 : vector<12x32xf32>
    %c40_28 = arith.constant 40 : index
    %c0_29 = arith.constant 0 : index
    %43 = vector.load %arg0[%c40_28, %c0_29] : memref<512x32xf32, #tpu.memory_space<vmem>>, vector<32x12xf32>
    %44 = arith.truncf %42 : vector<12x32xf32> to vector<12x32xbf16>
    %45 = arith.truncf %43 : vector<32x12xf32> to vector<32x12xbf16>
    %cst_30 = arith.constant dense<0.000000e+00> : vector<12x12xf32>
    %46 = tpu.matmul %44, %45, %cst_30 {dimension_numbers = #tpu.dot_dimension_numbers<[1], [0], [0], [1], [0, 0, 1, 1], [], []>} : vector<12x32xbf16>, vector<32x12xbf16>, vector<12x12xf32> -> vector<12x12xf32>
    %c72_31 = arith.constant 72 : index
    %c0_32 = arith.constant 0 : index
    %47 = vector.load %arg0[%c72_31, %c0_32] : memref<512x32xf32, #tpu.memory_space<vmem>>, vector<1x12xf32>
    %48 = vector.broadcast %47 : vector<1x12xf32> to vector<12x12xf32>
    %49 = arith.addf %46, %48 : vector<12x12xf32>
    %50 = arith.truncf %2 : vector<6x12xf32> to vector<6x12xbf16>
    %51 = arith.truncf %49 : vector<12x12xf32> to vector<12x12xbf16>
    %cst_33 = arith.constant dense<0.000000e+00> : vector<6x12xf32>
    %52 = tpu.matmul %50, %51, %cst_33 {dimension_numbers = #tpu.dot_dimension_numbers<[1], [0], [0], [1], [0, 0, 1, 1], [], []>} : vector<6x12xbf16>, vector<12x12xbf16>, vector<6x12xf32> -> vector<6x12xf32>
    %53 = arith.truncf %5 : vector<6x2xf32> to vector<6x2xbf16>
    %54 = arith.truncf %9 : vector<2x7xf32> to vector<2x7xbf16>
    %cst_34 = arith.constant dense<0.000000e+00> : vector<6x7xf32>
    %55 = tpu.matmul %53, %54, %cst_34 {dimension_numbers = #tpu.dot_dimension_numbers<[1], [0], [0], [1], [0, 0, 1, 1], [], []>} : vector<6x2xbf16>, vector<2x7xbf16>, vector<6x7xf32> -> vector<6x7xf32>
    %c112 = arith.constant 112 : index
    %c0_35 = arith.constant 0 : index
    %56 = vector.load %arg0[%c112, %c0_35] : memref<512x32xf32, #tpu.memory_space<vmem>>, vector<1x32xf32>
    %c80 = arith.constant 80 : index
    %c0_36 = arith.constant 0 : index
    %57 = vector.load %arg0[%c80, %c0_36] : memref<512x32xf32, #tpu.memory_space<vmem>>, vector<5x32xf32>
    %58 = arith.truncf %8 : vector<6x5xf32> to vector<6x5xbf16>
    %59 = arith.truncf %57 : vector<5x32xf32> to vector<5x32xbf16>
    %cst_37 = arith.constant dense<0.000000e+00> : vector<6x32xf32>
    %60 = tpu.matmul %58, %59, %cst_37 {dimension_numbers = #tpu.dot_dimension_numbers<[1], [0], [0], [1], [0, 0, 1, 1], [], []>} : vector<6x5xbf16>, vector<5x32xbf16>, vector<6x32xf32> -> vector<6x32xf32>
    %61 = vector.broadcast %56 : vector<1x32xf32> to vector<6x32xf32>
    %62 = arith.addf %61, %60 : vector<6x32xf32>
    %c88 = arith.constant 88 : index
    %c0_38 = arith.constant 0 : index
    %63 = vector.load %arg0[%c88, %c0_38] : memref<512x32xf32, #tpu.memory_space<vmem>>, vector<12x32xf32>
    %64 = arith.truncf %52 : vector<6x12xf32> to vector<6x12xbf16>
    %65 = arith.truncf %63 : vector<12x32xf32> to vector<12x32xbf16>
    %cst_39 = arith.constant dense<0.000000e+00> : vector<6x32xf32>
    %66 = tpu.matmul %64, %65, %cst_39 {dimension_numbers = #tpu.dot_dimension_numbers<[1], [0], [0], [1], [0, 0, 1, 1], [], []>} : vector<6x12xbf16>, vector<12x32xbf16>, vector<6x32xf32> -> vector<6x32xf32>
    %67 = arith.addf %62, %66 : vector<6x32xf32>
    %c104 = arith.constant 104 : index
    %c0_40 = arith.constant 0 : index
    %68 = vector.load %arg0[%c104, %c0_40] : memref<512x32xf32, #tpu.memory_space<vmem>>, vector<7x32xf32>
    %69 = arith.truncf %55 : vector<6x7xf32> to vector<6x7xbf16>
    %70 = arith.truncf %68 : vector<7x32xf32> to vector<7x32xbf16>
    %cst_41 = arith.constant dense<0.000000e+00> : vector<6x32xf32>
    %71 = tpu.matmul %69, %70, %cst_41 {dimension_numbers = #tpu.dot_dimension_numbers<[1], [0], [0], [1], [0, 0, 1, 1], [], []>} : vector<6x7xbf16>, vector<7x32xbf16>, vector<6x32xf32> -> vector<6x32xf32>
    %72 = arith.addf %67, %71 : vector<6x32xf32>
    %cst_42 = arith.constant 0.000000e+00 : f32
    %73 = vector.broadcast %cst_42 : f32 to vector<6x32xf32>
    %74 = arith.maximumf %72, %73 : vector<6x32xf32>
    %c120 = arith.constant 120 : index
    %c0_43 = arith.constant 0 : index
    %75 = vector.load %arg0[%c120, %c0_43] : memref<512x32xf32, #tpu.memory_space<vmem>>, vector<32x12xf32>
    %76 = arith.truncf %74 : vector<6x32xf32> to vector<6x32xbf16>
    %77 = arith.truncf %75 : vector<32x12xf32> to vector<32x12xbf16>
    %cst_44 = arith.constant dense<0.000000e+00> : vector<6x12xf32>
    %78 = tpu.matmul %76, %77, %cst_44 {dimension_numbers = #tpu.dot_dimension_numbers<[1], [0], [0], [1], [0, 0, 1, 1], [], []>} : vector<6x32xbf16>, vector<32x12xbf16>, vector<6x12xf32> -> vector<6x12xf32>
    %c152 = arith.constant 152 : index
    %c0_45 = arith.constant 0 : index
    %79 = vector.load %arg0[%c152, %c0_45] : memref<512x32xf32, #tpu.memory_space<vmem>>, vector<1x12xf32>
    %80 = vector.broadcast %79 : vector<1x12xf32> to vector<6x12xf32>
    %81 = arith.addf %78, %80 : vector<6x12xf32>
    %82 = arith.truncf %4 : vector<2x12xf32> to vector<2x12xbf16>
    %83 = arith.truncf %49 : vector<12x12xf32> to vector<12x12xbf16>
    %cst_46 = arith.constant dense<0.000000e+00> : vector<2x12xf32>
    %84 = tpu.matmul %82, %83, %cst_46 {dimension_numbers = #tpu.dot_dimension_numbers<[1], [0], [0], [1], [0, 0, 1, 1], [], []>} : vector<2x12xbf16>, vector<12x12xbf16>, vector<2x12xf32> -> vector<2x12xf32>
    %85 = arith.truncf %6 : vector<2x6xf32> to vector<2x6xbf16>
    %86 = arith.truncf %81 : vector<6x12xf32> to vector<6x12xbf16>
    %cst_47 = arith.constant dense<0.000000e+00> : vector<2x12xf32>
    %87 = tpu.matmul %85, %86, %cst_47 {dimension_numbers = #tpu.dot_dimension_numbers<[1], [0], [0], [1], [0, 0, 1, 1], [], []>} : vector<2x6xbf16>, vector<6x12xbf16>, vector<2x12xf32> -> vector<2x12xf32>
    %c200 = arith.constant 200 : index
    %c0_48 = arith.constant 0 : index
    %88 = vector.load %arg0[%c200, %c0_48] : memref<512x32xf32, #tpu.memory_space<vmem>>, vector<1x32xf32>
    %c160 = arith.constant 160 : index
    %c0_49 = arith.constant 0 : index
    %89 = vector.load %arg0[%c160, %c0_49] : memref<512x32xf32, #tpu.memory_space<vmem>>, vector<12x32xf32>
    %90 = arith.truncf %87 : vector<2x12xf32> to vector<2x12xbf16>
    %91 = arith.truncf %89 : vector<12x32xf32> to vector<12x32xbf16>
    %cst_50 = arith.constant dense<0.000000e+00> : vector<2x32xf32>
    %92 = tpu.matmul %90, %91, %cst_50 {dimension_numbers = #tpu.dot_dimension_numbers<[1], [0], [0], [1], [0, 0, 1, 1], [], []>} : vector<2x12xbf16>, vector<12x32xbf16>, vector<2x32xf32> -> vector<2x32xf32>
    %93 = vector.broadcast %88 : vector<1x32xf32> to vector<2x32xf32>
    %94 = arith.addf %93, %92 : vector<2x32xf32>
    %c176 = arith.constant 176 : index
    %c0_51 = arith.constant 0 : index
    %95 = vector.load %arg0[%c176, %c0_51] : memref<512x32xf32, #tpu.memory_space<vmem>>, vector<12x32xf32>
    %96 = arith.truncf %84 : vector<2x12xf32> to vector<2x12xbf16>
    %97 = arith.truncf %95 : vector<12x32xf32> to vector<12x32xbf16>
    %cst_52 = arith.constant dense<0.000000e+00> : vector<2x32xf32>
    %98 = tpu.matmul %96, %97, %cst_52 {dimension_numbers = #tpu.dot_dimension_numbers<[1], [0], [0], [1], [0, 0, 1, 1], [], []>} : vector<2x12xbf16>, vector<12x32xbf16>, vector<2x32xf32> -> vector<2x32xf32>
    %99 = arith.addf %94, %98 : vector<2x32xf32>
    %c192 = arith.constant 192 : index
    %c0_53 = arith.constant 0 : index
    %100 = vector.load %arg0[%c192, %c0_53] : memref<512x32xf32, #tpu.memory_space<vmem>>, vector<7x32xf32>
    %101 = arith.truncf %9 : vector<2x7xf32> to vector<2x7xbf16>
    %102 = arith.truncf %100 : vector<7x32xf32> to vector<7x32xbf16>
    %cst_54 = arith.constant dense<0.000000e+00> : vector<2x32xf32>
    %103 = tpu.matmul %101, %102, %cst_54 {dimension_numbers = #tpu.dot_dimension_numbers<[1], [0], [0], [1], [0, 0, 1, 1], [], []>} : vector<2x7xbf16>, vector<7x32xbf16>, vector<2x32xf32> -> vector<2x32xf32>
    %104 = arith.addf %99, %103 : vector<2x32xf32>
    %cst_55 = arith.constant 0.000000e+00 : f32
    %105 = vector.broadcast %cst_55 : f32 to vector<2x32xf32>
    %106 = arith.maximumf %104, %105 : vector<2x32xf32>
    %c208 = arith.constant 208 : index
    %c0_56 = arith.constant 0 : index
    %107 = vector.load %arg0[%c208, %c0_56] : memref<512x32xf32, #tpu.memory_space<vmem>>, vector<32x12xf32>
    %108 = arith.truncf %106 : vector<2x32xf32> to vector<2x32xbf16>
    %109 = arith.truncf %107 : vector<32x12xf32> to vector<32x12xbf16>
    %cst_57 = arith.constant dense<0.000000e+00> : vector<2x12xf32>
    %110 = tpu.matmul %108, %109, %cst_57 {dimension_numbers = #tpu.dot_dimension_numbers<[1], [0], [0], [1], [0, 0, 1, 1], [], []>} : vector<2x32xbf16>, vector<32x12xbf16>, vector<2x12xf32> -> vector<2x12xf32>
    %c240 = arith.constant 240 : index
    %c0_58 = arith.constant 0 : index
    %111 = vector.load %arg0[%c240, %c0_58] : memref<512x32xf32, #tpu.memory_space<vmem>>, vector<1x12xf32>
    %112 = vector.broadcast %111 : vector<1x12xf32> to vector<2x12xf32>
    %113 = arith.addf %110, %112 : vector<2x12xf32>
    %114 = arith.truncf %3 : vector<12x2xf32> to vector<12x2xbf16>
    %115 = arith.truncf %113 : vector<2x12xf32> to vector<2x12xbf16>
    %cst_59 = arith.constant dense<0.000000e+00> : vector<12x12xf32>
    %116 = tpu.matmul %114, %115, %cst_59 {dimension_numbers = #tpu.dot_dimension_numbers<[1], [0], [0], [1], [0, 0, 1, 1], [], []>} : vector<12x2xbf16>, vector<2x12xbf16>, vector<12x12xf32> -> vector<12x12xf32>
    %117 = arith.truncf %0 : vector<12x6xf32> to vector<12x6xbf16>
    %118 = arith.truncf %81 : vector<6x12xf32> to vector<6x12xbf16>
    %cst_60 = arith.constant dense<0.000000e+00> : vector<12x12xf32>
    %119 = tpu.matmul %117, %118, %cst_60 {dimension_numbers = #tpu.dot_dimension_numbers<[1], [0], [0], [1], [0, 0, 1, 1], [], []>} : vector<12x6xbf16>, vector<6x12xbf16>, vector<12x12xf32> -> vector<12x12xf32>
    %120 = arith.truncf %1 : vector<12x6xf32> to vector<12x6xbf16>
    %121 = arith.truncf %81 : vector<6x12xf32> to vector<6x12xbf16>
    %cst_61 = arith.constant dense<0.000000e+00> : vector<12x12xf32>
    %122 = tpu.matmul %120, %121, %cst_61 {dimension_numbers = #tpu.dot_dimension_numbers<[1], [0], [0], [1], [0, 0, 1, 1], [], []>} : vector<12x6xbf16>, vector<6x12xbf16>, vector<12x12xf32> -> vector<12x12xf32>
    %c312 = arith.constant 312 : index
    %c0_62 = arith.constant 0 : index
    %123 = vector.load %arg0[%c312, %c0_62] : memref<512x32xf32, #tpu.memory_space<vmem>>, vector<1x32xf32>
    %c248 = arith.constant 248 : index
    %c0_63 = arith.constant 0 : index
    %124 = vector.load %arg0[%c248, %c0_63] : memref<512x32xf32, #tpu.memory_space<vmem>>, vector<12x32xf32>
    %125 = arith.truncf %49 : vector<12x12xf32> to vector<12x12xbf16>
    %126 = arith.truncf %124 : vector<12x32xf32> to vector<12x32xbf16>
    %cst_64 = arith.constant dense<0.000000e+00> : vector<12x32xf32>
    %127 = tpu.matmul %125, %126, %cst_64 {dimension_numbers = #tpu.dot_dimension_numbers<[1], [0], [0], [1], [0, 0, 1, 1], [], []>} : vector<12x12xbf16>, vector<12x32xbf16>, vector<12x32xf32> -> vector<12x32xf32>
    %128 = vector.broadcast %123 : vector<1x32xf32> to vector<12x32xf32>
    %129 = arith.addf %128, %127 : vector<12x32xf32>
    %c264 = arith.constant 264 : index
    %c0_65 = arith.constant 0 : index
    %130 = vector.load %arg0[%c264, %c0_65] : memref<512x32xf32, #tpu.memory_space<vmem>>, vector<12x32xf32>
    %131 = arith.truncf %119 : vector<12x12xf32> to vector<12x12xbf16>
    %132 = arith.truncf %130 : vector<12x32xf32> to vector<12x32xbf16>
    %cst_66 = arith.constant dense<0.000000e+00> : vector<12x32xf32>
    %133 = tpu.matmul %131, %132, %cst_66 {dimension_numbers = #tpu.dot_dimension_numbers<[1], [0], [0], [1], [0, 0, 1, 1], [], []>} : vector<12x12xbf16>, vector<12x32xbf16>, vector<12x32xf32> -> vector<12x32xf32>
    %134 = arith.addf %129, %133 : vector<12x32xf32>
    %c280 = arith.constant 280 : index
    %c0_67 = arith.constant 0 : index
    %135 = vector.load %arg0[%c280, %c0_67] : memref<512x32xf32, #tpu.memory_space<vmem>>, vector<12x32xf32>
    %136 = arith.truncf %122 : vector<12x12xf32> to vector<12x12xbf16>
    %137 = arith.truncf %135 : vector<12x32xf32> to vector<12x32xbf16>
    %cst_68 = arith.constant dense<0.000000e+00> : vector<12x32xf32>
    %138 = tpu.matmul %136, %137, %cst_68 {dimension_numbers = #tpu.dot_dimension_numbers<[1], [0], [0], [1], [0, 0, 1, 1], [], []>} : vector<12x12xbf16>, vector<12x32xbf16>, vector<12x32xf32> -> vector<12x32xf32>
    %139 = arith.addf %134, %138 : vector<12x32xf32>
    %c296 = arith.constant 296 : index
    %c0_69 = arith.constant 0 : index
    %140 = vector.load %arg0[%c296, %c0_69] : memref<512x32xf32, #tpu.memory_space<vmem>>, vector<12x32xf32>
    %141 = arith.truncf %116 : vector<12x12xf32> to vector<12x12xbf16>
    %142 = arith.truncf %140 : vector<12x32xf32> to vector<12x32xbf16>
    %cst_70 = arith.constant dense<0.000000e+00> : vector<12x32xf32>
    %143 = tpu.matmul %141, %142, %cst_70 {dimension_numbers = #tpu.dot_dimension_numbers<[1], [0], [0], [1], [0, 0, 1, 1], [], []>} : vector<12x12xbf16>, vector<12x32xbf16>, vector<12x32xf32> -> vector<12x32xf32>
    %144 = arith.addf %139, %143 : vector<12x32xf32>
    %cst_71 = arith.constant 0.000000e+00 : f32
    %145 = vector.broadcast %cst_71 : f32 to vector<12x32xf32>
    %146 = arith.maximumf %144, %145 : vector<12x32xf32>
    %c320 = arith.constant 320 : index
    %c0_72 = arith.constant 0 : index
    %147 = vector.load %arg0[%c320, %c0_72] : memref<512x32xf32, #tpu.memory_space<vmem>>, vector<32x10xf32>
    %148 = arith.truncf %146 : vector<12x32xf32> to vector<12x32xbf16>
    %149 = arith.truncf %147 : vector<32x10xf32> to vector<32x10xbf16>
    %cst_73 = arith.constant dense<0.000000e+00> : vector<12x10xf32>
    %150 = tpu.matmul %148, %149, %cst_73 {dimension_numbers = #tpu.dot_dimension_numbers<[1], [0], [0], [1], [0, 0, 1, 1], [], []>} : vector<12x32xbf16>, vector<32x10xbf16>, vector<12x10xf32> -> vector<12x10xf32>
    %c352 = arith.constant 352 : index
    %c0_74 = arith.constant 0 : index
    %151 = vector.load %arg0[%c352, %c0_74] : memref<512x32xf32, #tpu.memory_space<vmem>>, vector<1x10xf32>
    %152 = vector.broadcast %151 : vector<1x10xf32> to vector<12x10xf32>
    %153 = arith.addf %150, %152 : vector<12x10xf32>
    %154 = arith.truncf %2 : vector<6x12xf32> to vector<6x12xbf16>
    %155 = arith.truncf %153 : vector<12x10xf32> to vector<12x10xbf16>
    %cst_75 = arith.constant dense<0.000000e+00> : vector<6x10xf32>
    %156 = tpu.matmul %154, %155, %cst_75 {dimension_numbers = #tpu.dot_dimension_numbers<[1], [0], [0], [1], [0, 0, 1, 1], [], []>} : vector<6x12xbf16>, vector<12x10xbf16>, vector<6x10xf32> -> vector<6x10xf32>
    %157 = arith.truncf %5 : vector<6x2xf32> to vector<6x2xbf16>
    %158 = arith.truncf %113 : vector<2x12xf32> to vector<2x12xbf16>
    %cst_76 = arith.constant dense<0.000000e+00> : vector<6x12xf32>
    %159 = tpu.matmul %157, %158, %cst_76 {dimension_numbers = #tpu.dot_dimension_numbers<[1], [0], [0], [1], [0, 0, 1, 1], [], []>} : vector<6x2xbf16>, vector<2x12xbf16>, vector<6x12xf32> -> vector<6x12xf32>
    %c408 = arith.constant 408 : index
    %c0_77 = arith.constant 0 : index
    %160 = vector.load %arg0[%c408, %c0_77] : memref<512x32xf32, #tpu.memory_space<vmem>>, vector<1x32xf32>
    %c360 = arith.constant 360 : index
    %c0_78 = arith.constant 0 : index
    %161 = vector.load %arg0[%c360, %c0_78] : memref<512x32xf32, #tpu.memory_space<vmem>>, vector<12x32xf32>
    %162 = arith.truncf %81 : vector<6x12xf32> to vector<6x12xbf16>
    %163 = arith.truncf %161 : vector<12x32xf32> to vector<12x32xbf16>
    %cst_79 = arith.constant dense<0.000000e+00> : vector<6x32xf32>
    %164 = tpu.matmul %162, %163, %cst_79 {dimension_numbers = #tpu.dot_dimension_numbers<[1], [0], [0], [1], [0, 0, 1, 1], [], []>} : vector<6x12xbf16>, vector<12x32xbf16>, vector<6x32xf32> -> vector<6x32xf32>
    %165 = vector.broadcast %160 : vector<1x32xf32> to vector<6x32xf32>
    %166 = arith.addf %165, %164 : vector<6x32xf32>
    %c376 = arith.constant 376 : index
    %c0_80 = arith.constant 0 : index
    %167 = vector.load %arg0[%c376, %c0_80] : memref<512x32xf32, #tpu.memory_space<vmem>>, vector<10x32xf32>
    %168 = arith.truncf %156 : vector<6x10xf32> to vector<6x10xbf16>
    %169 = arith.truncf %167 : vector<10x32xf32> to vector<10x32xbf16>
    %cst_81 = arith.constant dense<0.000000e+00> : vector<6x32xf32>
    %170 = tpu.matmul %168, %169, %cst_81 {dimension_numbers = #tpu.dot_dimension_numbers<[1], [0], [0], [1], [0, 0, 1, 1], [], []>} : vector<6x10xbf16>, vector<10x32xbf16>, vector<6x32xf32> -> vector<6x32xf32>
    %171 = arith.addf %166, %170 : vector<6x32xf32>
    %c392 = arith.constant 392 : index
    %c0_82 = arith.constant 0 : index
    %172 = vector.load %arg0[%c392, %c0_82] : memref<512x32xf32, #tpu.memory_space<vmem>>, vector<12x32xf32>
    %173 = arith.truncf %159 : vector<6x12xf32> to vector<6x12xbf16>
    %174 = arith.truncf %172 : vector<12x32xf32> to vector<12x32xbf16>
    %cst_83 = arith.constant dense<0.000000e+00> : vector<6x32xf32>
    %175 = tpu.matmul %173, %174, %cst_83 {dimension_numbers = #tpu.dot_dimension_numbers<[1], [0], [0], [1], [0, 0, 1, 1], [], []>} : vector<6x12xbf16>, vector<12x32xbf16>, vector<6x32xf32> -> vector<6x32xf32>
    %176 = arith.addf %171, %175 : vector<6x32xf32>
    %cst_84 = arith.constant 0.000000e+00 : f32
    %177 = vector.broadcast %cst_84 : f32 to vector<6x32xf32>
    %178 = arith.maximumf %176, %177 : vector<6x32xf32>
    %c416 = arith.constant 416 : index
    %c0_85 = arith.constant 0 : index
    %179 = vector.load %arg0[%c416, %c0_85] : memref<512x32xf32, #tpu.memory_space<vmem>>, vector<32x10xf32>
    %180 = arith.truncf %178 : vector<6x32xf32> to vector<6x32xbf16>
    %181 = arith.truncf %179 : vector<32x10xf32> to vector<32x10xbf16>
    %cst_86 = arith.constant dense<0.000000e+00> : vector<6x10xf32>
    %182 = tpu.matmul %180, %181, %cst_86 {dimension_numbers = #tpu.dot_dimension_numbers<[1], [0], [0], [1], [0, 0, 1, 1], [], []>} : vector<6x32xbf16>, vector<32x10xbf16>, vector<6x10xf32> -> vector<6x10xf32>
    %c448 = arith.constant 448 : index
    %c0_87 = arith.constant 0 : index
    %183 = vector.load %arg0[%c448, %c0_87] : memref<512x32xf32, #tpu.memory_space<vmem>>, vector<1x10xf32>
    %184 = vector.broadcast %183 : vector<1x10xf32> to vector<6x10xf32>
    %185 = arith.addf %182, %184 : vector<6x10xf32>
    %c456 = arith.constant 456 : index
    %c0_88 = arith.constant 0 : index
    %186 = vector.load %arg0[%c456, %c0_88] : memref<512x32xf32, #tpu.memory_space<vmem>>, vector<10x24xf32>
    %187 = arith.truncf %185 : vector<6x10xf32> to vector<6x10xbf16>
    %188 = arith.truncf %186 : vector<10x24xf32> to vector<10x24xbf16>
    %cst_89 = arith.constant dense<0.000000e+00> : vector<6x24xf32>
    %189 = tpu.matmul %187, %188, %cst_89 {dimension_numbers = #tpu.dot_dimension_numbers<[1], [0], [0], [1], [0, 0, 1, 1], [], []>} : vector<6x10xbf16>, vector<10x24xbf16>, vector<6x24xf32> -> vector<6x24xf32>
    %c472 = arith.constant 472 : index
    %c0_90 = arith.constant 0 : index
    %190 = vector.load %arg0[%c472, %c0_90] : memref<512x32xf32, #tpu.memory_space<vmem>>, vector<1x24xf32>
    %191 = vector.broadcast %190 : vector<1x24xf32> to vector<6x24xf32>
    %192 = arith.addf %189, %191 : vector<6x24xf32>
    %cst_91 = arith.constant 0.000000e+00 : f32
    %193 = vector.broadcast %cst_91 : f32 to vector<6x24xf32>
    %194 = arith.maximumf %192, %193 : vector<6x24xf32>
    %c480 = arith.constant 480 : index
    %c0_92 = arith.constant 0 : index
    %195 = vector.load %arg0[%c480, %c0_92] : memref<512x32xf32, #tpu.memory_space<vmem>>, vector<24x5xf32>
    %196 = arith.truncf %194 : vector<6x24xf32> to vector<6x24xbf16>
    %197 = arith.truncf %195 : vector<24x5xf32> to vector<24x5xbf16>
    %cst_93 = arith.constant dense<0.000000e+00> : vector<6x5xf32>
    %198 = tpu.matmul %196, %197, %cst_93 {dimension_numbers = #tpu.dot_dimension_numbers<[1], [0], [0], [1], [0, 0, 1, 1], [], []>} : vector<6x24xbf16>, vector<24x5xbf16>, vector<6x5xf32> -> vector<6x5xf32>
    %c504 = arith.constant 504 : index
    %c0_94 = arith.constant 0 : index
    %199 = vector.load %arg0[%c504, %c0_94] : memref<512x32xf32, #tpu.memory_space<vmem>>, vector<1x5xf32>
    %200 = vector.broadcast %199 : vector<1x5xf32> to vector<6x5xf32>
    %201 = arith.addf %198, %200 : vector<6x5xf32>
    %c0_95 = arith.constant 0 : index
    %c0_96 = arith.constant 0 : index
    %202 = vector.load %arg3[%c0_95, %c0_96] : memref<6x5xf32, #tpu.memory_space<vmem>>, vector<6x5xf32>
    tpu.vector_store %arg3[%c0_95, %c0_96], %201 {strides = array<i32>} : memref<6x5xf32, #tpu.memory_space<vmem>>, vector<6x5xf32>,
    return
  }
}

</mosaic_0001>

<llo_original>
// kernel: tpu_custom_call.1
$region0: #{tpu_custom_call.1}
  #allocation0 [shape = 'u32[]', space=smem, size = 0x4, offset = 0x4, fixed_abs, tag = 'smem constant byte address 0x4 - core index']
  #allocation1 [shape = 'u32[144,128]{1,0:T(1,128)}', space=vmem, size = 0x12000, scoped, tag = 'internal scratch']
  %s0 = inlined_call_operand.vmem [shape: f32[512,32], index: 0, kind: input, shape index: {}]
  %s1 = inlined_call_operand.vmem [shape: f32[80,12], index: 1, kind: input, shape index: {}]
  %s2 = inlined_call_operand.vmem [shape: f32[32,7], index: 2, kind: input, shape index: {}]
  %s3 = inlined_call_operand.hbm [shape: f32[6,5], index: 3, kind: output, shape index: {}]
  %s4 = sld [smem:[#allocation0]]
  $region22: #{tpu_custom_call.1} parent=0
    _
  %s6 = ssub.s32 1, %s4
  %s7 = scalar_select 0, %s6, %s4
  $region1: #{tpu_custom_call.1} parent=0
    #allocation2 [shape = 'u8[4096]{0}', space=vmem, size = 0x1000, scoped, tag = 'output window, operand 0, single buffered']
    #allocation3 [shape = 's32[1]{0}', space=sflag, size = 0x4, scoped, tag = 'scoped memory for tpu_custom_call.1']
    %8 = vsyncpa [#allocation3], 0
    // Predicated region
    $region2: #{tpu_custom_call.1} parent=1 // pred_check
      _
    $region3: #{tpu_custom_call.1} parent=1 // pred_check_branch
      %10 = sbr.rel (0) target = $region5
    $region4: #{tpu_custom_call.1} parent=1 // pred_region
      _
    $region5: #{tpu_custom_call.1} parent=1 // pred_fallthru
      _
    // Predicated region
    $region6: #{tpu_custom_call.1} parent=1 // pred_check
      _
    $region7: #{tpu_custom_call.1} parent=1 // pred_check_branch
      %12 = sbr.rel (0) target = $region9
    $region8: #{tpu_custom_call.1} parent=1 // pred_region
      _
    $region9: #{tpu_custom_call.1} parent=1 // pred_fallthru
      _
    // Predicated region
    $region10: #{tpu_custom_call.1} parent=1 // pred_check
      _
    $region11: #{tpu_custom_call.1} parent=1 // pred_check_branch
      %14 = sbr.rel (0) target = $region13
    $region12: #{tpu_custom_call.1} parent=1 // pred_region
      _
    $region13: #{tpu_custom_call.1} parent=1 // pred_fallthru
      _
    %v16 = vld [vmem:[%s1] sm:$0xff]
    %v17 = vld [vmem:[%s1 + $0x8] sm:$0xf]
    %v18 = vld [vmem:[%s1 + $0x10] sm:$0xff]
    %v19 = vld [vmem:[%s1 + $0x18] sm:$0xf]
    %v20 = vld [vmem:[%s1 + $0x20] sm:$0x3f]
    %v21 = vld [vmem:[%s1 + $0x28] sm:$0xff]
    %v22 = vld [vmem:[%s1 + $0x30] sm:$0xf]
    %v23 = vld [vmem:[%s1 + $0x38] sm:$0x3]
    %v24 = vld [vmem:[%s1 + $0x40] sm:$0x3f]
    %v25 = vld [vmem:[%s1 + $0x48] sm:$0x3]
    %v26 = vld [vmem:[%s2] sm:$0xff]
    %v27 = vld [vmem:[%s2 + $0x8] sm:$0xf]
    %v28 = vld [vmem:[%s2 + $0x10] sm:$0x3f]
    %v29 = vld [vmem:[%s2 + $0x18] sm:$0x3]
    %v30 = vpack.c.bf16 %v22, %v21
    %v31 = vpack.c.bf16 %v29, %v29
    %vm32 = vcmask 15360
    %v34 = vsel %vm32, %v30, 0
    %vm36 = vcmask 1040384
    %v38 = vsel %vm36, %v31, 0
    %40 = vmatprep.subr.bf16.mxu0 0
    %41 = vmatpush1.bf16.msra.mxu0 %v38
    %42 = vmatprep.subr.bf16.mxu0 0
    %43 = vmatpush1.bf16.msra.mxu0 0
    %44 = vmatprep.subr.bf16.mxu0 0
    %45 = vmatpush1.bf16.msra.mxu0 0
    %46 = vmatprep.subr.bf16.mxu0 0
    %47 = vmatpush1.bf16.msra.mxu0 0
    %48 = vmatprep.subr.bf16.mxu0 0
    %49 = vmatpush1.bf16.msra.mxu0 0
    %50 = vmatprep.subr.bf16.mxu0 0
    %51 = vmatpush1.bf16.msra.mxu0 0
    %52 = vmatprep.subr.bf16.mxu0 0
    %53 = vmatpush1.bf16.msra.mxu0 0
    %54 = vmatprep.subr.bf16.mxu0 0
    %55 = vmatpush1.bf16.msra.mxu0 0
    %56 = vmatprep.subr.bf16.mxu0 0
    %57 = vmatpush1.bf16.msra.mxu0 0
    %58 = vmatprep.subr.bf16.mxu0 0
    %59 = vmatpush1.bf16.msra.mxu0 0
    %60 = vmatprep.subr.bf16.mxu0 0
    %61 = vmatpush1.bf16.msra.mxu0 0
    %62 = vmatprep.subr.bf16.mxu0 0
    %63 = vmatpush1.bf16.msra.mxu0 0
    %64 = vmatprep.subr.bf16.mxu0 0
    %65 = vmatpush1.bf16.msra.mxu0 0
    %66 = vmatprep.subr.bf16.mxu0 0
    %67 = vmatpush1.bf16.msra.mxu0 0
    %68 = vmatprep.subr.bf16.mxu0 0
    %69 = vmatpush1.bf16.msra.mxu0 0
    %70 = vmatprep.subr.bf16.mxu0 0
    %71 = vmatpush1.bf16.msra.mxu0 0
    %72 = vmatprep.mubr.bf16.mxu0 0
    %73 = vmatmul.mubr.bf16.gmra.mrb[0].mxu0 %v34
    %v74 = vpop.f32.mrb[0].mxu0
    %v75 = vadd.f32 0.0, %v74
    %v76 = vpop.f32.mrb[0].mxu0
    %v77 = vpop.f32.mrb[0].mxu0
    %v78 = vadd.f32 0.0, %v77
    %v79 = vpop.f32.mrb[0].mxu0
    %80 = vdwg.mxu0
    %v81 = vpack.c.bf16 %v17, %v16
    %v82 = vpack.c.bf16 %v28, %v28
    %vm83 = vcmask 48128
    %v85 = vsel %vm83, %v81, 0
    %vm87 = vcmask 1042432
    %v89 = vsel %vm87, %v82, 0
    %91 = vmatprep.subr.bf16.mxu0 0
    %92 = vmatpush1.bf16.msra.mxu0 %v89
    %93 = vmatprep.subr.bf16.mxu0 0
    %94 = vmatpush1.bf16.msra.mxu0 0
    %95 = vmatprep.subr.bf16.mxu0 0
    %96 = vmatpush1.bf16.msra.mxu0 0
    %97 = vmatprep.subr.bf16.mxu0 0
    %98 = vmatpush1.bf16.msra.mxu0 0
    %99 = vmatprep.subr.bf16.mxu0 0
    %100 = vmatpush1.bf16.msra.mxu0 0
    %101 = vmatprep.subr.bf16.mxu0 0
    %102 = vmatpush1.bf16.msra.mxu0 0
    %103 = vmatprep.subr.bf16.mxu0 0
    %104 = vmatpush1.bf16.msra.mxu0 0
    %105 = vmatprep.subr.bf16.mxu0 0
    %106 = vmatpush1.bf16.msra.mxu0 0
    %107 = vmatprep.subr.bf16.mxu0 0
    %108 = vmatpush1.bf16.msra.mxu0 0
    %109 = vmatprep.subr.bf16.mxu0 0
    %110 = vmatpush1.bf16.msra.mxu0 0
    %111 = vmatprep.subr.bf16.mxu0 0
    %112 = vmatpush1.bf16.msra.mxu0 0
    %113 = vmatprep.subr.bf16.mxu0 0
    %114 = vmatpush1.bf16.msra.mxu0 0
    %115 = vmatprep.subr.bf16.mxu0 0
    %116 = vmatpush1.bf16.msra.mxu0 0
    %117 = vmatprep.subr.bf16.mxu0 0
    %118 = vmatpush1.bf16.msra.mxu0 0
    %119 = vmatprep.subr.bf16.mxu0 0
    %120 = vmatpush1.bf16.msra.mxu0 0
    %121 = vmatprep.subr.bf16.mxu0 0
    %122 = vmatpush1.bf16.msra.mxu0 0
    %123 = vmatprep.mubr.bf16.mxu0 0
    %124 = vmatmul.mubr.bf16.gmra.mrb[0].mxu0 %v85
    %v125 = vpop.f32.mrb[0].mxu0
    %v126 = vadd.f32 0.0, %v125
    %v127 = vpop.f32.mrb[0].mxu0
    %v128 = vpop.f32.mrb[0].mxu0
    %v129 = vadd.f32 0.0, %v128
    %v130 = vpop.f32.mrb[0].mxu0
    %131 = vdwg.mxu0
    %v132 = vpack.c.bf16 %v19, %v18
    %v134 = vsel %vm83, %v132, 0
    %136 = vmatprep.subr.bf16.mxu0 0
    %137 = vmatpush1.bf16.msra.mxu0 %v89
    %138 = vmatprep.subr.bf16.mxu0 0
    %139 = vmatpush1.bf16.msra.mxu0 0
    %140 = vmatprep.subr.bf16.mxu0 0
    %141 = vmatpush1.bf16.msra.mxu0 0
    %142 = vmatprep.subr.bf16.mxu0 0
    %143 = vmatpush1.bf16.msra.mxu0 0
    %144 = vmatprep.subr.bf16.mxu0 0
    %145 = vmatpush1.bf16.msra.mxu0 0
    %146 = vmatprep.subr.bf16.mxu0 0
    %147 = vmatpush1.bf16.msra.mxu0 0
    %148 = vmatprep.subr.bf16.mxu0 0
    %149 = vmatpush1.bf16.msra.mxu0 0
    %150 = vmatprep.subr.bf16.mxu0 0
    %151 = vmatpush1.bf16.msra.mxu0 0
    %152 = vmatprep.subr.bf16.mxu0 0
    %153 = vmatpush1.bf16.msra.mxu0 0
    %154 = vmatprep.subr.bf16.mxu0 0
    %155 = vmatpush1.bf16.msra.mxu0 0
    %156 = vmatprep.subr.bf16.mxu0 0
    %157 = vmatpush1.bf16.msra.mxu0 0
    %158 = vmatprep.subr.bf16.mxu0 0
    %159 = vmatpush1.bf16.msra.mxu0 0
    %160 = vmatprep.subr.bf16.mxu0 0
    %161 = vmatpush1.bf16.msra.mxu0 0
    %162 = vmatprep.subr.bf16.mxu0 0
    %163 = vmatpush1.bf16.msra.mxu0 0
    %164 = vmatprep.subr.bf16.mxu0 0
    %165 = vmatpush1.bf16.msra.mxu0 0
    %166 = vmatprep.subr.bf16.mxu0 0
    %167 = vmatpush1.bf16.msra.mxu0 0
    %168 = vmatprep.mubr.bf16.mxu0 0
    %169 = vmatmul.mubr.bf16.gmra.mrb[0].mxu0 %v134
    %v170 = vpop.f32.mrb[0].mxu0
    %v171 = vadd.f32 0.0, %v170
    %v172 = vpop.f32.mrb[0].mxu0
    %v173 = vpop.f32.mrb[0].mxu0
    %v174 = vadd.f32 0.0, %v173
    %v175 = vpop.f32.mrb[0].mxu0
    %176 = vdwg.mxu0
    %v177 = vld [vmem:[%s0 + $0x20] sm:$0x1]
    %v178 = vld [vmem:[%s0] sm:$0x3f]
    %v179 = vpack.c.bf16 %v27, %v26
    %v180 = vpack.c.bf16 %v178, %v178
    %v182 = vsel %vm83, %v179, 0
    %v185 = vsel %vm87, %v180, 0
    %187 = vmatprep.subr.bf16.mxu0 0
    %188 = vmatpush1.bf16.msra.mxu0 %v185
    %189 = vmatprep.subr.bf16.mxu0 0
    %190 = vmatpush1.bf16.msra.mxu0 0
    %191 = vmatprep.subr.bf16.mxu0 0
    %192 = vmatpush1.bf16.msra.mxu0 0
    %193 = vmatprep.subr.bf16.mxu0 0
    %194 = vmatpush1.bf16.msra.mxu0 0
    %195 = vmatprep.subr.bf16.mxu0 0
    %196 = vmatpush1.bf16.msra.mxu0 0
    %197 = vmatprep.subr.bf16.mxu0 0
    %198 = vmatpush1.bf16.msra.mxu0 0
    %199 = vmatprep.subr.bf16.mxu0 0
    %200 = vmatpush1.bf16.msra.mxu0 0
    %201 = vmatprep.subr.bf16.mxu0 0
    %202 = vmatpush1.bf16.msra.mxu0 0
    %203 = vmatprep.subr.bf16.mxu0 0
    %204 = vmatpush1.bf16.msra.mxu0 0
    %205 = vmatprep.subr.bf16.mxu0 0
    %206 = vmatpush1.bf16.msra.mxu0 0
    %207 = vmatprep.subr.bf16.mxu0 0
    %208 = vmatpush1.bf16.msra.mxu0 0
    %209 = vmatprep.subr.bf16.mxu0 0
    %210 = vmatpush1.bf16.msra.mxu0 0
    %211 = vmatprep.subr.bf16.mxu0 0
    %212 = vmatpush1.bf16.msra.mxu0 0
    %213 = vmatprep.subr.bf16.mxu0 0
    %214 = vmatpush1.bf16.msra.mxu0 0
    %215 = vmatprep.subr.bf16.mxu0 0
    %216 = vmatpush1.bf16.msra.mxu0 0
    %217 = vmatprep.subr.bf16.mxu0 0
    %218 = vmatpush1.bf16.msra.mxu0 0
    %219 = vmatprep.mubr.bf16.mxu0 0
    %220 = vmatmul.mubr.bf16.gmra.mrb[0].mxu0 %v182
    %v221 = vpop.f32.mrb[0].mxu0
    %v222 = vadd.f32 0.0, %v221
    %v223 = vpop.f32.mrb[0].mxu0
    %v224 = vpop.f32.mrb[0].mxu0
    %v225 = vadd.f32 0.0, %v224
    %v226 = vpop.f32.mrb[0].mxu0
    %227 = vdwg.mxu0
    %v228 = vlaneseq
    %v229 = vshrl.u32 %v228, 7
    %v230 = vsub.s32 0, %v229
    %v231 = vrot.slane %v177, %v230
    %v232 = vadd.f32 %v231, %v222
    %v233 = vadd.f32 %v231, %v225
    %v234 = vld [vmem:[%s0 + $0x8] sm:$0x1f]
    %v235 = vpack.c.bf16 %v129, %v126
    %v236 = vpack.c.bf16 %v234, %v234
    %vm237 = vcmask 39936
    %v239 = vsel %vm237, %v235, 0
    %vm241 = vcmask 1041408
    %v242 = vsel %vm241, 4294967295, 65535
    %v243 = vsel %vm87, %v242, 0
    %v245 = vand.u32 %v236, %v243
    %247 = vmatprep.subr.bf16.mxu0 0
    %248 = vmatpush1.bf16.msra.mxu0 %v245
    %249 = vmatprep.subr.bf16.mxu0 0
    %250 = vmatpush1.bf16.msra.mxu0 0
    %251 = vmatprep.subr.bf16.mxu0 0
    %252 = vmatpush1.bf16.msra.mxu0 0
    %253 = vmatprep.subr.bf16.mxu0 0
    %254 = vmatpush1.bf16.msra.mxu0 0
    %255 = vmatprep.subr.bf16.mxu0 0
    %256 = vmatpush1.bf16.msra.mxu0 0
    %257 = vmatprep.subr.bf16.mxu0 0
    %258 = vmatpush1.bf16.msra.mxu0 0
    %259 = vmatprep.subr.bf16.mxu0 0
    %260 = vmatpush1.bf16.msra.mxu0 0
    %261 = vmatprep.subr.bf16.mxu0 0
    %262 = vmatpush1.bf16.msra.mxu0 0
    %263 = vmatprep.subr.bf16.mxu0 0
    %264 = vmatpush1.bf16.msra.mxu0 0
    %265 = vmatprep.subr.bf16.mxu0 0
    %266 = vmatpush1.bf16.msra.mxu0 0
    %267 = vmatprep.subr.bf16.mxu0 0
    %268 = vmatpush1.bf16.msra.mxu0 0
    %269 = vmatprep.subr.bf16.mxu0 0
    %270 = vmatpush1.bf16.msra.mxu0 0
    %271 = vmatprep.subr.bf16.mxu0 0
    %272 = vmatpush1.bf16.msra.mxu0 0
    %273 = vmatprep.subr.bf16.mxu0 0
    %274 = vmatpush1.bf16.msra.mxu0 0
    %275 = vmatprep.subr.bf16.mxu0 0
    %276 = vmatpush1.bf16.msra.mxu0 0
    %277 = vmatprep.subr.bf16.mxu0 0
    %278 = vmatpush1.bf16.msra.mxu0 0
    %279 = vmatprep.mubr.bf16.mxu0 0
    %280 = vmatmul.mubr.bf16.gmra.mrb[0].mxu0 %v239
    %v281 = vpop.f32.mrb[0].mxu0
    %v282 = vadd.f32 0.0, %v281
    %v283 = vpop.f32.mrb[0].mxu0
    %v284 = vpop.f32.mrb[0].mxu0
    %v285 = vadd.f32 0.0, %v284
    %v286 = vpop.f32.mrb[0].mxu0
    %287 = vdwg.mxu0
    %v288 = vadd.f32 %v232, %v282
    %v289 = vadd.f32 %v233, %v285
    %v290 = vld [vmem:[%s0 + $0x10] sm:$0x1f]
    %v291 = vpack.c.bf16 %v174, %v171
    %v292 = vpack.c.bf16 %v290, %v290
    %v294 = vsel %vm237, %v291, 0
    %v297 = vand.u32 %v292, %v243
    %299 = vmatprep.subr.bf16.mxu0 0
    %300 = vmatpush1.bf16.msra.mxu0 %v297
    %301 = vmatprep.subr.bf16.mxu0 0
    %302 = vmatpush1.bf16.msra.mxu0 0
    %303 = vmatprep.subr.bf16.mxu0 0
    %304 = vmatpush1.bf16.msra.mxu0 0
    %305 = vmatprep.subr.bf16.mxu0 0
    %306 = vmatpush1.bf16.msra.mxu0 0
    %307 = vmatprep.subr.bf16.mxu0 0
    %308 = vmatpush1.bf16.msra.mxu0 0
    %309 = vmatprep.subr.bf16.mxu0 0
    %310 = vmatpush1.bf16.msra.mxu0 0
    %311 = vmatprep.subr.bf16.mxu0 0
    %312 = vmatpush1.bf16.msra.mxu0 0
    %313 = vmatprep.subr.bf16.mxu0 0
    %314 = vmatpush1.bf16.msra.mxu0 0
    %315 = vmatprep.subr.bf16.mxu0 0
    %316 = vmatpush1.bf16.msra.mxu0 0
    %317 = vmatprep.subr.bf16.mxu0 0
    %318 = vmatpush1.bf16.msra.mxu0 0
    %319 = vmatprep.subr.bf16.mxu0 0
    %320 = vmatpush1.bf16.msra.mxu0 0
    %321 = vmatprep.subr.bf16.mxu0 0
    %322 = vmatpush1.bf16.msra.mxu0 0
    %323 = vmatprep.subr.bf16.mxu0 0
    %324 = vmatpush1.bf16.msra.mxu0 0
    %325 = vmatprep.subr.bf16.mxu0 0
    %326 = vmatpush1.bf16.msra.mxu0 0
    %327 = vmatprep.subr.bf16.mxu0 0
    %328 = vmatpush1.bf16.msra.mxu0 0
    %329 = vmatprep.subr.bf16.mxu0 0
    %330 = vmatpush1.bf16.msra.mxu0 0
    %331 = vmatprep.mubr.bf16.mxu0 0
    %332 = vmatmul.mubr.bf16.gmra.mrb[0].mxu0 %v294
    %v333 = vpop.f32.mrb[0].mxu0
    %v334 = vadd.f32 0.0, %v333
    %v335 = vpop.f32.mrb[0].mxu0
    %v336 = vpop.f32.mrb[0].mxu0
    %v337 = vadd.f32 0.0, %v336
    %v338 = vpop.f32.mrb[0].mxu0
    %339 = vdwg.mxu0
    %v340 = vadd.f32 %v288, %v334
    %v341 = vadd.f32 %v289, %v337
    %v342 = vld [vmem:[%s0 + $0x18] sm:$0x7f]
    %v343 = vpack.c.bf16 %v78, %v75
    %v344 = vpack.c.bf16 %v342, %v342
    %vm345 = vcmask 56320
    %v347 = vsel %vm345, %v343, 0
    %vm349 = vcmask 1043456
    %v350 = vsel %vm87, 4294967295, 65535
    %v351 = vsel %vm349, %v350, 0
    %v353 = vand.u32 %v344, %v351
    %355 = vmatprep.subr.bf16.mxu0 0
    %356 = vmatpush1.bf16.msra.mxu0 %v353
    %357 = vmatprep.subr.bf16.mxu0 0
    %358 = vmatpush1.bf16.msra.mxu0 0
    %359 = vmatprep.subr.bf16.mxu0 0
    %360 = vmatpush1.bf16.msra.mxu0 0
    %361 = vmatprep.subr.bf16.mxu0 0
    %362 = vmatpush1.bf16.msra.mxu0 0
    %363 = vmatprep.subr.bf16.mxu0 0
    %364 = vmatpush1.bf16.msra.mxu0 0
    %365 = vmatprep.subr.bf16.mxu0 0
    %366 = vmatpush1.bf16.msra.mxu0 0
    %367 = vmatprep.subr.bf16.mxu0 0
    %368 = vmatpush1.bf16.msra.mxu0 0
    %369 = vmatprep.subr.bf16.mxu0 0
    %370 = vmatpush1.bf16.msra.mxu0 0
    %371 = vmatprep.subr.bf16.mxu0 0
    %372 = vmatpush1.bf16.msra.mxu0 0
    %373 = vmatprep.subr.bf16.mxu0 0
    %374 = vmatpush1.bf16.msra.mxu0 0
    %375 = vmatprep.subr.bf16.mxu0 0
    %376 = vmatpush1.bf16.msra.mxu0 0
    %377 = vmatprep.subr.bf16.mxu0 0
    %378 = vmatpush1.bf16.msra.mxu0 0
    %379 = vmatprep.subr.bf16.mxu0 0
    %380 = vmatpush1.bf16.msra.mxu0 0
    %381 = vmatprep.subr.bf16.mxu0 0
    %382 = vmatpush1.bf16.msra.mxu0 0
    %383 = vmatprep.subr.bf16.mxu0 0
    %384 = vmatpush1.bf16.msra.mxu0 0
    %385 = vmatprep.subr.bf16.mxu0 0
    %386 = vmatpush1.bf16.msra.mxu0 0
    %387 = vmatprep.mubr.bf16.mxu0 0
    %388 = vmatmul.mubr.bf16.gmra.mrb[0].mxu0 %v347
    %v389 = vpop.f32.mrb[0].mxu0
    %v390 = vadd.f32 0.0, %v389
    %v391 = vpop.f32.mrb[0].mxu0
    %v392 = vpop.f32.mrb[0].mxu0
    %v393 = vadd.f32 0.0, %v392
    %v394 = vpop.f32.mrb[0].mxu0
    %395 = vdwg.mxu0
    %v396 = vadd.f32 %v340, %v390
    %v397 = vadd.f32 %v341, %v393
    %v398 = vmax.f32 %v396, 0.0
    %v399 = vmax.f32 %v397, 0.0
    %v400 = vld [vmem:[%s0 + $0x28] sm:$0xff]
    %v401 = vld [vmem:[%s0 + $0x30] sm:$0xff]
    %v402 = vld [vmem:[%s0 + $0x38] sm:$0xff]
    %v403 = vld [vmem:[%s0 + $0x40] sm:$0xff]
    %v404 = vpack.c.bf16 %v399, %v398
    %v405 = vpack.c.bf16 %v401, %v400
    %v406 = vpack.c.bf16 %v403, %v402
    %v407 = vld [vmem:[%s0 + $0x48] sm:$0x1]
    %v408 = vlaneseq
    %v409 = vshrl.u32 %v408, 7
    %v410 = vsub.s32 0, %v409
    %v411 = vrot.slane %v407, %v410
    %vm412 = vcmask 261120
    %v414 = vsel %vm412, %v404, 0
    %416 = vmatprep.subr.bf16.mxu0 0
    %417 = vmatpush1.bf16.msra.mxu0 %v405
    %418 = vmatprep.subr.bf16.mxu0 0
    %419 = vmatpush1.bf16.msra.mxu0 %v406
    %420 = vmatprep.subr.bf16.mxu0 0
    %421 = vmatpush1.bf16.msra.mxu0 0
    %422 = vmatprep.subr.bf16.mxu0 0
    %423 = vmatpush1.bf16.msra.mxu0 0
    %424 = vmatprep.subr.bf16.mxu0 0
    %425 = vmatpush1.bf16.msra.mxu0 0
    %426 = vmatprep.subr.bf16.mxu0 0
    %427 = vmatpush1.bf16.msra.mxu0 0
    %428 = vmatprep.subr.bf16.mxu0 0
    %429 = vmatpush1.bf16.msra.mxu0 0
    %430 = vmatprep.subr.bf16.mxu0 0
    %431 = vmatpush1.bf16.msra.mxu0 0
    %432 = vmatprep.subr.bf16.mxu0 0
    %433 = vmatpush1.bf16.msra.mxu0 0
    %434 = vmatprep.subr.bf16.mxu0 0
    %435 = vmatpush1.bf16.msra.mxu0 0
    %436 = vmatprep.subr.bf16.mxu0 0
    %437 = vmatpush1.bf16.msra.mxu0 0
    %438 = vmatprep.subr.bf16.mxu0 0
    %439 = vmatpush1.bf16.msra.mxu0 0
    %440 = vmatprep.subr.bf16.mxu0 0
    %441 = vmatpush1.bf16.msra.mxu0 0
    %442 = vmatprep.subr.bf16.mxu0 0
    %443 = vmatpush1.bf16.msra.mxu0 0
    %444 = vmatprep.subr.bf16.mxu0 0
    %445 = vmatpush1.bf16.msra.mxu0 0
    %446 = vmatprep.subr.bf16.mxu0 0
    %447 = vmatpush1.bf16.msra.mxu0 0
    %448 = vmatprep.mubr.bf16.mxu0 0
    %449 = vmatmul.mubr.bf16.gmra.mrb[0].mxu0 %v414
    %v450 = vpop.f32.mrb[0].mxu0
    %v451 = vadd.f32 %v411, %v450
    %v452 = vpop.f32.mrb[0].mxu0
    %v453 = vpop.f32.mrb[0].mxu0
    %v454 = vadd.f32 %v411, %v453
    %v455 = vpop.f32.mrb[0].mxu0
    %456 = vdwg.mxu0
    %v457 = vpack.c.bf16 %v20, %v20
    %v458 = vpack.c.bf16 %v454, %v451
    %vm459 = vcmask 97280
    %v461 = vsel %vm459, %v457, 0
    %vm463 = vcmask 1045504
    %v465 = vsel %vm463, %v458, 0
    %467 = vmatprep.subr.bf16.mxu0 0
    %468 = vmatpush1.bf16.msra.mxu0 %v465
    %469 = vmatprep.subr.bf16.mxu0 0
    %470 = vmatpush1.bf16.msra.mxu0 0
    %471 = vmatprep.subr.bf16.mxu0 0
    %472 = vmatpush1.bf16.msra.mxu0 0
    %473 = vmatprep.subr.bf16.mxu0 0
    %474 = vmatpush1.bf16.msra.mxu0 0
    %475 = vmatprep.subr.bf16.mxu0 0
    %476 = vmatpush1.bf16.msra.mxu0 0
    %477 = vmatprep.subr.bf16.mxu0 0
    %478 = vmatpush1.bf16.msra.mxu0 0
    %479 = vmatprep.subr.bf16.mxu0 0
    %480 = vmatpush1.bf16.msra.mxu0 0
    %481 = vmatprep.subr.bf16.mxu0 0
    %482 = vmatpush1.bf16.msra.mxu0 0
    %483 = vmatprep.subr.bf16.mxu0 0
    %484 = vmatpush1.bf16.msra.mxu0 0
    %485 = vmatprep.subr.bf16.mxu0 0
    %486 = vmatpush1.bf16.msra.mxu0 0
    %487 = vmatprep.subr.bf16.mxu0 0
    %488 = vmatpush1.bf16.msra.mxu0 0
    %489 = vmatprep.subr.bf16.mxu0 0
    %490 = vmatpush1.bf16.msra.mxu0 0
    %491 = vmatprep.subr.bf16.mxu0 0
    %492 = vmatpush1.bf16.msra.mxu0 0
    %493 = vmatprep.subr.bf16.mxu0 0
    %494 = vmatpush1.bf16.msra.mxu0 0
    %495 = vmatprep.subr.bf16.mxu0 0
    %496 = vmatpush1.bf16.msra.mxu0 0
    %497 = vmatprep.subr.bf16.mxu0 0
    %498 = vmatpush1.bf16.msra.mxu0 0
    %499 = vmatprep.mubr.bf16.mxu0 0
    %500 = vmatmul.mubr.bf16.gmra.mrb[0].mxu0 %v461
    %v501 = vpop.f32.mrb[0].mxu0
    %v502 = vadd.f32 0.0, %v501
    %v503 = vpop.f32.mrb[0].mxu0
    %v504 = vpop.f32.mrb[0].mxu0
    %v505 = vpop.f32.mrb[0].mxu0
    %506 = vdwg.mxu0
    %v507 = vpack.c.bf16 %v24, %v24
    %v509 = vsel %vm32, %v507, 0
    %511 = vmatprep.subr.bf16.mxu0 0
    %512 = vmatpush1.bf16.msra.mxu0 %v38
    %513 = vmatprep.subr.bf16.mxu0 0
    %514 = vmatpush1.bf16.msra.mxu0 0
    %515 = vmatprep.subr.bf16.mxu0 0
    %516 = vmatpush1.bf16.msra.mxu0 0
    %517 = vmatprep.subr.bf16.mxu0 0
    %518 = vmatpush1.bf16.msra.mxu0 0
    %519 = vmatprep.subr.bf16.mxu0 0
    %520 = vmatpush1.bf16.msra.mxu0 0
    %521 = vmatprep.subr.bf16.mxu0 0
    %522 = vmatpush1.bf16.msra.mxu0 0
    %523 = vmatprep.subr.bf16.mxu0 0
    %524 = vmatpush1.bf16.msra.mxu0 0
    %525 = vmatprep.subr.bf16.mxu0 0
    %526 = vmatpush1.bf16.msra.mxu0 0
    %527 = vmatprep.subr.bf16.mxu0 0
    %528 = vmatpush1.bf16.msra.mxu0 0
    %529 = vmatprep.subr.bf16.mxu0 0
    %530 = vmatpush1.bf16.msra.mxu0 0
    %531 = vmatprep.subr.bf16.mxu0 0
    %532 = vmatpush1.bf16.msra.mxu0 0
    %533 = vmatprep.subr.bf16.mxu0 0
    %534 = vmatpush1.bf16.msra.mxu0 0
    %535 = vmatprep.subr.bf16.mxu0 0
    %536 = vmatpush1.bf16.msra.mxu0 0
    %537 = vmatprep.subr.bf16.mxu0 0
    %538 = vmatpush1.bf16.msra.mxu0 0
    %539 = vmatprep.subr.bf16.mxu0 0
    %540 = vmatpush1.bf16.msra.mxu0 0
    %541 = vmatprep.subr.bf16.mxu0 0
    %542 = vmatpush1.bf16.msra.mxu0 0
    %543 = vmatprep.mubr.bf16.mxu0 0
    %544 = vmatmul.mubr.bf16.gmra.mrb[0].mxu0 %v509
    %v545 = vpop.f32.mrb[0].mxu0
    %v546 = vadd.f32 0.0, %v545
    %v547 = vpop.f32.mrb[0].mxu0
    %v548 = vpop.f32.mrb[0].mxu0
    %v549 = vpop.f32.mrb[0].mxu0
    %550 = vdwg.mxu0
    %v551 = vld [vmem:[%s0 + $0x70] sm:$0x1]
    %v552 = vld [vmem:[%s0 + $0x50] sm:$0x1f]
    %v553 = vpack.c.bf16 %v552, %v552
    %v554 = vsel %vm237, %v82, 0
    %v557 = vand.u32 %v553, %v243
    %559 = vmatprep.subr.bf16.mxu0 0
    %560 = vmatpush1.bf16.msra.mxu0 %v557
    %561 = vmatprep.subr.bf16.mxu0 0
    %562 = vmatpush1.bf16.msra.mxu0 0
    %563 = vmatprep.subr.bf16.mxu0 0
    %564 = vmatpush1.bf16.msra.mxu0 0
    %565 = vmatprep.subr.bf16.mxu0 0
    %566 = vmatpush1.bf16.msra.mxu0 0
    %567 = vmatprep.subr.bf16.mxu0 0
    %568 = vmatpush1.bf16.msra.mxu0 0
    %569 = vmatprep.subr.bf16.mxu0 0
    %570 = vmatpush1.bf16.msra.mxu0 0
    %571 = vmatprep.subr.bf16.mxu0 0
    %572 = vmatpush1.bf16.msra.mxu0 0
    %573 = vmatprep.subr.bf16.mxu0 0
    %574 = vmatpush1.bf16.msra.mxu0 0
    %575 = vmatprep.subr.bf16.mxu0 0
    %576 = vmatpush1.bf16.msra.mxu0 0
    %577 = vmatprep.subr.bf16.mxu0 0
    %578 = vmatpush1.bf16.msra.mxu0 0
    %579 = vmatprep.subr.bf16.mxu0 0
    %580 = vmatpush1.bf16.msra.mxu0 0
    %581 = vmatprep.subr.bf16.mxu0 0
    %582 = vmatpush1.bf16.msra.mxu0 0
    %583 = vmatprep.subr.bf16.mxu0 0
    %584 = vmatpush1.bf16.msra.mxu0 0
    %585 = vmatprep.subr.bf16.mxu0 0
    %586 = vmatpush1.bf16.msra.mxu0 0
    %587 = vmatprep.subr.bf16.mxu0 0
    %588 = vmatpush1.bf16.msra.mxu0 0
    %589 = vmatprep.subr.bf16.mxu0 0
    %590 = vmatpush1.bf16.msra.mxu0 0
    %591 = vmatprep.mubr.bf16.mxu0 0
    %592 = vmatmul.mubr.bf16.gmra.mrb[0].mxu0 %v554
    %v593 = vpop.f32.mrb[0].mxu0
    %v594 = vadd.f32 0.0, %v593
    %v595 = vpop.f32.mrb[0].mxu0
    %v596 = vpop.f32.mrb[0].mxu0
    %v597 = vpop.f32.mrb[0].mxu0
    %598 = vdwg.mxu0
    %v599 = vlaneseq
    %v600 = vshrl.u32 %v599, 7
    %v601 = vsub.s32 0, %v600
    %v602 = vrot.slane %v551, %v601
    %v603 = vadd.f32 %v602, %v594
    %v604 = vld [vmem:[%s0 + $0x58] sm:$0xff]
    %v605 = vld [vmem:[%s0 + $0x60] sm:$0xf]
    %v606 = vpack.c.bf16 %v502, %v502
    %v607 = vpack.c.bf16 %v605, %v604
    %v609 = vsel %vm459, %v606, 0
    %v612 = vsel %vm463, %v607, 0
    %614 = vmatprep.subr.bf16.mxu0 0
    %615 = vmatpush1.bf16.msra.mxu0 %v612
    %616 = vmatprep.subr.bf16.mxu0 0
    %617 = vmatpush1.bf16.msra.mxu0 0
    %618 = vmatprep.subr.bf16.mxu0 0
    %619 = vmatpush1.bf16.msra.mxu0 0
    %620 = vmatprep.subr.bf16.mxu0 0
    %621 = vmatpush1.bf16.msra.mxu0 0
    %622 = vmatprep.subr.bf16.mxu0 0
    %623 = vmatpush1.bf16.msra.mxu0 0
    %624 = vmatprep.subr.bf16.mxu0 0
    %625 = vmatpush1.bf16.msra.mxu0 0
    %626 = vmatprep.subr.bf16.mxu0 0
    %627 = vmatpush1.bf16.msra.mxu0 0
    %628 = vmatprep.subr.bf16.mxu0 0
    %629 = vmatpush1.bf16.msra.mxu0 0
    %630 = vmatprep.subr.bf16.mxu0 0
    %631 = vmatpush1.bf16.msra.mxu0 0
    %632 = vmatprep.subr.bf16.mxu0 0
    %633 = vmatpush1.bf16.msra.mxu0 0
    %634 = vmatprep.subr.bf16.mxu0 0
    %635 = vmatpush1.bf16.msra.mxu0 0
    %636 = vmatprep.subr.bf16.mxu0 0
    %637 = vmatpush1.bf16.msra.mxu0 0
    %638 = vmatprep.subr.bf16.mxu0 0
    %639 = vmatpush1.bf16.msra.mxu0 0
    %640 = vmatprep.subr.bf16.mxu0 0
    %641 = vmatpush1.bf16.msra.mxu0 0
    %642 = vmatprep.subr.bf16.mxu0 0
    %643 = vmatpush1.bf16.msra.mxu0 0
    %644 = vmatprep.subr.bf16.mxu0 0
    %645 = vmatpush1.bf16.msra.mxu0 0
    %646 = vmatprep.mubr.bf16.mxu0 0
    %647 = vmatmul.mubr.bf16.gmra.mrb[0].mxu0 %v609
    %v648 = vpop.f32.mrb[0].mxu0
    %v649 = vadd.f32 0.0, %v648
    %v650 = vpop.f32.mrb[0].mxu0
    %v651 = vpop.f32.mrb[0].mxu0
    %v652 = vpop.f32.mrb[0].mxu0
    %653 = vdwg.mxu0
    %v654 = vadd.f32 %v603, %v649
    %v655 = vld [vmem:[%s0 + $0x68] sm:$0x7f]
    %v656 = vpack.c.bf16 %v546, %v546
    %v657 = vpack.c.bf16 %v655, %v655
    %v659 = vsel %vm345, %v656, 0
    %v662 = vand.u32 %v657, %v351
    %664 = vmatprep.subr.bf16.mxu0 0
    %665 = vmatpush1.bf16.msra.mxu0 %v662
    %666 = vmatprep.subr.bf16.mxu0 0
    %667 = vmatpush1.bf16.msra.mxu0 0
    %668 = vmatprep.subr.bf16.mxu0 0
    %669 = vmatpush1.bf16.msra.mxu0 0
    %670 = vmatprep.subr.bf16.mxu0 0
    %671 = vmatpush1.bf16.msra.mxu0 0
    %672 = vmatprep.subr.bf16.mxu0 0
    %673 = vmatpush1.bf16.msra.mxu0 0
    %674 = vmatprep.subr.bf16.mxu0 0
    %675 = vmatpush1.bf16.msra.mxu0 0
    %676 = vmatprep.subr.bf16.mxu0 0
    %677 = vmatpush1.bf16.msra.mxu0 0
    %678 = vmatprep.subr.bf16.mxu0 0
    %679 = vmatpush1.bf16.msra.mxu0 0
    %680 = vmatprep.subr.bf16.mxu0 0
    %681 = vmatpush1.bf16.msra.mxu0 0
    %682 = vmatprep.subr.bf16.mxu0 0
    %683 = vmatpush1.bf16.msra.mxu0 0
    %684 = vmatprep.subr.bf16.mxu0 0
    %685 = vmatpush1.bf16.msra.mxu0 0
    %686 = vmatprep.subr.bf16.mxu0 0
    %687 = vmatpush1.bf16.msra.mxu0 0
    %688 = vmatprep.subr.bf16.mxu0 0
    %689 = vmatpush1.bf16.msra.mxu0 0
    %690 = vmatprep.subr.bf16.mxu0 0
    %691 = vmatpush1.bf16.msra.mxu0 0
    %692 = vmatprep.subr.bf16.mxu0 0
    %693 = vmatpush1.bf16.msra.mxu0 0
    %694 = vmatprep.subr.bf16.mxu0 0
    %695 = vmatpush1.bf16.msra.mxu0 0
    %696 = vmatprep.mubr.bf16.mxu0 0
    %697 = vmatmul.mubr.bf16.gmra.mrb[0].mxu0 %v659
    %v698 = vpop.f32.mrb[0].mxu0
    %v699 = vadd.f32 0.0, %v698
    %v700 = vpop.f32.mrb[0].mxu0
    %v701 = vpop.f32.mrb[0].mxu0
    %v702 = vpop.f32.mrb[0].mxu0
    %703 = vdwg.mxu0
    %v704 = vadd.f32 %v654, %v699
    %v705 = vmax.f32 %v704, 0.0
    %v706 = vld [vmem:[%s0 + $0x78] sm:$0xff]
    %v707 = vld [vmem:[%s0 + $0x80] sm:$0xff]
    %v708 = vld [vmem:[%s0 + $0x88] sm:$0xff]
    %v709 = vld [vmem:[%s0 + $0x90] sm:$0xff]
    %v710 = vpack.c.bf16 %v705, %v705
    %v711 = vpack.c.bf16 %v707, %v706
    %v712 = vpack.c.bf16 %v709, %v708
    %v713 = vld [vmem:[%s0 + $0x98] sm:$0x1]
    %v714 = vlaneseq
    %v715 = vshrl.u32 %v714, 7
    %v716 = vsub.s32 0, %v715
    %v717 = vrot.slane %v713, %v716
    %v719 = vsel %vm412, %v710, 0
    %721 = vmatprep.subr.bf16.mxu0 0
    %722 = vmatpush1.bf16.msra.mxu0 %v711
    %723 = vmatprep.subr.bf16.mxu0 0
    %724 = vmatpush1.bf16.msra.mxu0 %v712
    %725 = vmatprep.subr.bf16.mxu0 0
    %726 = vmatpush1.bf16.msra.mxu0 0
    %727 = vmatprep.subr.bf16.mxu0 0
    %728 = vmatpush1.bf16.msra.mxu0 0
    %729 = vmatprep.subr.bf16.mxu0 0
    %730 = vmatpush1.bf16.msra.mxu0 0
    %731 = vmatprep.subr.bf16.mxu0 0
    %732 = vmatpush1.bf16.msra.mxu0 0
    %733 = vmatprep.subr.bf16.mxu0 0
    %734 = vmatpush1.bf16.msra.mxu0 0
    %735 = vmatprep.subr.bf16.mxu0 0
    %736 = vmatpush1.bf16.msra.mxu0 0
    %737 = vmatprep.subr.bf16.mxu0 0
    %738 = vmatpush1.bf16.msra.mxu0 0
    %739 = vmatprep.subr.bf16.mxu0 0
    %740 = vmatpush1.bf16.msra.mxu0 0
    %741 = vmatprep.subr.bf16.mxu0 0
    %742 = vmatpush1.bf16.msra.mxu0 0
    %743 = vmatprep.subr.bf16.mxu0 0
    %744 = vmatpush1.bf16.msra.mxu0 0
    %745 = vmatprep.subr.bf16.mxu0 0
    %746 = vmatpush1.bf16.msra.mxu0 0
    %747 = vmatprep.subr.bf16.mxu0 0
    %748 = vmatpush1.bf16.msra.mxu0 0
    %749 = vmatprep.subr.bf16.mxu0 0
    %750 = vmatpush1.bf16.msra.mxu0 0
    %751 = vmatprep.subr.bf16.mxu0 0
    %752 = vmatpush1.bf16.msra.mxu0 0
    %753 = vmatprep.mubr.bf16.mxu0 0
    %754 = vmatmul.mubr.bf16.gmra.mrb[0].mxu0 %v719
    %v755 = vpop.f32.mrb[0].mxu0
    %v756 = vadd.f32 %v717, %v755
    %v757 = vpop.f32.mrb[0].mxu0
    %v758 = vpop.f32.mrb[0].mxu0
    %v759 = vpop.f32.mrb[0].mxu0
    %760 = vdwg.mxu0
    %v761 = vpack.c.bf16 %v23, %v23
    %v763 = vsel %vm459, %v761, 0
    %765 = vmatprep.subr.bf16.mxu0 0
    %766 = vmatpush1.bf16.msra.mxu0 %v465
    %767 = vmatprep.subr.bf16.mxu0 0
    %768 = vmatpush1.bf16.msra.mxu0 0
    %769 = vmatprep.subr.bf16.mxu0 0
    %770 = vmatpush1.bf16.msra.mxu0 0
    %771 = vmatprep.subr.bf16.mxu0 0
    %772 = vmatpush1.bf16.msra.mxu0 0
    %773 = vmatprep.subr.bf16.mxu0 0
    %774 = vmatpush1.bf16.msra.mxu0 0
    %775 = vmatprep.subr.bf16.mxu0 0
    %776 = vmatpush1.bf16.msra.mxu0 0
    %777 = vmatprep.subr.bf16.mxu0 0
    %778 = vmatpush1.bf16.msra.mxu0 0
    %779 = vmatprep.subr.bf16.mxu0 0
    %780 = vmatpush1.bf16.msra.mxu0 0
    %781 = vmatprep.subr.bf16.mxu0 0
    %782 = vmatpush1.bf16.msra.mxu0 0
    %783 = vmatprep.subr.bf16.mxu0 0
    %784 = vmatpush1.bf16.msra.mxu0 0
    %785 = vmatprep.subr.bf16.mxu0 0
    %786 = vmatpush1.bf16.msra.mxu0 0
    %787 = vmatprep.subr.bf16.mxu0 0
    %788 = vmatpush1.bf16.msra.mxu0 0
    %789 = vmatprep.subr.bf16.mxu0 0
    %790 = vmatpush1.bf16.msra.mxu0 0
    %791 = vmatprep.subr.bf16.mxu0 0
    %792 = vmatpush1.bf16.msra.mxu0 0
    %793 = vmatprep.subr.bf16.mxu0 0
    %794 = vmatpush1.bf16.msra.mxu0 0
    %795 = vmatprep.subr.bf16.mxu0 0
    %796 = vmatpush1.bf16.msra.mxu0 0
    %797 = vmatprep.mubr.bf16.mxu0 0
    %798 = vmatmul.mubr.bf16.gmra.mrb[0].mxu0 %v763
    %v799 = vpop.f32.mrb[0].mxu0
    %v800 = vadd.f32 0.0, %v799
    %v801 = vpop.f32.mrb[0].mxu0
    %v802 = vpop.f32.mrb[0].mxu0
    %v803 = vpop.f32.mrb[0].mxu0
    %804 = vdwg.mxu0
    %v805 = vpack.c.bf16 %v25, %v25
    %v806 = vpack.c.bf16 %v756, %v756
    %v808 = vsel %vm83, %v805, 0
    %v811 = vsel %vm87, %v806, 0
    %813 = vmatprep.subr.bf16.mxu0 0
    %814 = vmatpush1.bf16.msra.mxu0 %v811
    %815 = vmatprep.subr.bf16.mxu0 0
    %816 = vmatpush1.bf16.msra.mxu0 0
    %817 = vmatprep.subr.bf16.mxu0 0
    %818 = vmatpush1.bf16.msra.mxu0 0
    %819 = vmatprep.subr.bf16.mxu0 0
    %820 = vmatpush1.bf16.msra.mxu0 0
    %821 = vmatprep.subr.bf16.mxu0 0
    %822 = vmatpush1.bf16.msra.mxu0 0
    %823 = vmatprep.subr.bf16.mxu0 0
    %824 = vmatpush1.bf16.msra.mxu0 0
    %825 = vmatprep.subr.bf16.mxu0 0
    %826 = vmatpush1.bf16.msra.mxu0 0
    %827 = vmatprep.subr.bf16.mxu0 0
    %828 = vmatpush1.bf16.msra.mxu0 0
    %829 = vmatprep.subr.bf16.mxu0 0
    %830 = vmatpush1.bf16.msra.mxu0 0
    %831 = vmatprep.subr.bf16.mxu0 0
    %832 = vmatpush1.bf16.msra.mxu0 0
    %833 = vmatprep.subr.bf16.mxu0 0
    %834 = vmatpush1.bf16.msra.mxu0 0
    %835 = vmatprep.subr.bf16.mxu0 0
    %836 = vmatpush1.bf16.msra.mxu0 0
    %837 = vmatprep.subr.bf16.mxu0 0
    %838 = vmatpush1.bf16.msra.mxu0 0
    %839 = vmatprep.subr.bf16.mxu0 0
    %840 = vmatpush1.bf16.msra.mxu0 0
    %841 = vmatprep.subr.bf16.mxu0 0
    %842 = vmatpush1.bf16.msra.mxu0 0
    %843 = vmatprep.subr.bf16.mxu0 0
    %844 = vmatpush1.bf16.msra.mxu0 0
    %845 = vmatprep.mubr.bf16.mxu0 0
    %846 = vmatmul.mubr.bf16.gmra.mrb[0].mxu0 %v808
    %v847 = vpop.f32.mrb[0].mxu0
    %v848 = vadd.f32 0.0, %v847
    %v849 = vpop.f32.mrb[0].mxu0
    %v850 = vpop.f32.mrb[0].mxu0
    %v851 = vpop.f32.mrb[0].mxu0
    %852 = vdwg.mxu0
    %v853 = vld [vmem:[%s0 + $0xc8] sm:$0x1]
    %v854 = vld [vmem:[%s0 + $0xa0] sm:$0xff]
    %v855 = vld [vmem:[%s0 + $0xa8] sm:$0xf]
    %v856 = vpack.c.bf16 %v848, %v848
    %v857 = vpack.c.bf16 %v855, %v854
    %v859 = vsel %vm459, %v856, 0
    %v862 = vsel %vm463, %v857, 0
    %864 = vmatprep.subr.bf16.mxu0 0
    %865 = vmatpush1.bf16.msra.mxu0 %v862
    %866 = vmatprep.subr.bf16.mxu0 0
    %867 = vmatpush1.bf16.msra.mxu0 0
    %868 = vmatprep.subr.bf16.mxu0 0
    %869 = vmatpush1.bf16.msra.mxu0 0
    %870 = vmatprep.subr.bf16.mxu0 0
    %871 = vmatpush1.bf16.msra.mxu0 0
    %872 = vmatprep.subr.bf16.mxu0 0
    %873 = vmatpush1.bf16.msra.mxu0 0
    %874 = vmatprep.subr.bf16.mxu0 0
    %875 = vmatpush1.bf16.msra.mxu0 0
    %876 = vmatprep.subr.bf16.mxu0 0
    %877 = vmatpush1.bf16.msra.mxu0 0
    %878 = vmatprep.subr.bf16.mxu0 0
    %879 = vmatpush1.bf16.msra.mxu0 0
    %880 = vmatprep.subr.bf16.mxu0 0
    %881 = vmatpush1.bf16.msra.mxu0 0
    %882 = vmatprep.subr.bf16.mxu0 0
    %883 = vmatpush1.bf16.msra.mxu0 0
    %884 = vmatprep.subr.bf16.mxu0 0
    %885 = vmatpush1.bf16.msra.mxu0 0
    %886 = vmatprep.subr.bf16.mxu0 0
    %887 = vmatpush1.bf16.msra.mxu0 0
    %888 = vmatprep.subr.bf16.mxu0 0
    %889 = vmatpush1.bf16.msra.mxu0 0
    %890 = vmatprep.subr.bf16.mxu0 0
    %891 = vmatpush1.bf16.msra.mxu0 0
    %892 = vmatprep.subr.bf16.mxu0 0
    %893 = vmatpush1.bf16.msra.mxu0 0
    %894 = vmatprep.subr.bf16.mxu0 0
    %895 = vmatpush1.bf16.msra.mxu0 0
    %896 = vmatprep.mubr.bf16.mxu0 0
    %897 = vmatmul.mubr.bf16.gmra.mrb[0].mxu0 %v859
    %v898 = vpop.f32.mrb[0].mxu0
    %v899 = vadd.f32 0.0, %v898
    %v900 = vpop.f32.mrb[0].mxu0
    %v901 = vpop.f32.mrb[0].mxu0
    %v902 = vpop.f32.mrb[0].mxu0
    %903 = vdwg.mxu0
    %v904 = vlaneseq
    %v905 = vshrl.u32 %v904, 7
    %v906 = vsub.s32 0, %v905
    %v907 = vrot.slane %v853, %v906
    %v908 = vadd.f32 %v907, %v899
    %v909 = vld [vmem:[%s0 + $0xb0] sm:$0xff]
    %v910 = vld [vmem:[%s0 + $0xb8] sm:$0xf]
    %v911 = vpack.c.bf16 %v800, %v800
    %v912 = vpack.c.bf16 %v910, %v909
    %v914 = vsel %vm459, %v911, 0
    %v917 = vsel %vm463, %v912, 0
    %919 = vmatprep.subr.bf16.mxu0 0
    %920 = vmatpush1.bf16.msra.mxu0 %v917
    %921 = vmatprep.subr.bf16.mxu0 0
    %922 = vmatpush1.bf16.msra.mxu0 0
    %923 = vmatprep.subr.bf16.mxu0 0
    %924 = vmatpush1.bf16.msra.mxu0 0
    %925 = vmatprep.subr.bf16.mxu0 0
    %926 = vmatpush1.bf16.msra.mxu0 0
    %927 = vmatprep.subr.bf16.mxu0 0
    %928 = vmatpush1.bf16.msra.mxu0 0
    %929 = vmatprep.subr.bf16.mxu0 0
    %930 = vmatpush1.bf16.msra.mxu0 0
    %931 = vmatprep.subr.bf16.mxu0 0
    %932 = vmatpush1.bf16.msra.mxu0 0
    %933 = vmatprep.subr.bf16.mxu0 0
    %934 = vmatpush1.bf16.msra.mxu0 0
    %935 = vmatprep.subr.bf16.mxu0 0
    %936 = vmatpush1.bf16.msra.mxu0 0
    %937 = vmatprep.subr.bf16.mxu0 0
    %938 = vmatpush1.bf16.msra.mxu0 0
    %939 = vmatprep.subr.bf16.mxu0 0
    %940 = vmatpush1.bf16.msra.mxu0 0
    %941 = vmatprep.subr.bf16.mxu0 0
    %942 = vmatpush1.bf16.msra.mxu0 0
    %943 = vmatprep.subr.bf16.mxu0 0
    %944 = vmatpush1.bf16.msra.mxu0 0
    %945 = vmatprep.subr.bf16.mxu0 0
    %946 = vmatpush1.bf16.msra.mxu0 0
    %947 = vmatprep.subr.bf16.mxu0 0
    %948 = vmatpush1.bf16.msra.mxu0 0
    %949 = vmatprep.subr.bf16.mxu0 0
    %950 = vmatpush1.bf16.msra.mxu0 0
    %951 = vmatprep.mubr.bf16.mxu0 0
    %952 = vmatmul.mubr.bf16.gmra.mrb[0].mxu0 %v914
    %v953 = vpop.f32.mrb[0].mxu0
    %v954 = vadd.f32 0.0, %v953
    %v955 = vpop.f32.mrb[0].mxu0
    %v956 = vpop.f32.mrb[0].mxu0
    %v957 = vpop.f32.mrb[0].mxu0
    %958 = vdwg.mxu0
    %v959 = vadd.f32 %v908, %v954
    %v960 = vld [vmem:[%s0 + $0xc0] sm:$0x7f]
    %v961 = vpack.c.bf16 %v960, %v960
    %v962 = vsel %vm345, %v31, 0
    %v965 = vand.u32 %v961, %v351
    %967 = vmatprep.subr.bf16.mxu0 0
    %968 = vmatpush1.bf16.msra.mxu0 %v965
    %969 = vmatprep.subr.bf16.mxu0 0
    %970 = vmatpush1.bf16.msra.mxu0 0
    %971 = vmatprep.subr.bf16.mxu0 0
    %972 = vmatpush1.bf16.msra.mxu0 0
    %973 = vmatprep.subr.bf16.mxu0 0
    %974 = vmatpush1.bf16.msra.mxu0 0
    %975 = vmatprep.subr.bf16.mxu0 0
    %976 = vmatpush1.bf16.msra.mxu0 0
    %977 = vmatprep.subr.bf16.mxu0 0
    %978 = vmatpush1.bf16.msra.mxu0 0
    %979 = vmatprep.subr.bf16.mxu0 0
    %980 = vmatpush1.bf16.msra.mxu0 0
    %981 = vmatprep.subr.bf16.mxu0 0
    %982 = vmatpush1.bf16.msra.mxu0 0
    %983 = vmatprep.subr.bf16.mxu0 0
    %984 = vmatpush1.bf16.msra.mxu0 0
    %985 = vmatprep.subr.bf16.mxu0 0
    %986 = vmatpush1.bf16.msra.mxu0 0
    %987 = vmatprep.subr.bf16.mxu0 0
    %988 = vmatpush1.bf16.msra.mxu0 0
    %989 = vmatprep.subr.bf16.mxu0 0
    %990 = vmatpush1.bf16.msra.mxu0 0
    %991 = vmatprep.subr.bf16.mxu0 0
    %992 = vmatpush1.bf16.msra.mxu0 0
    %993 = vmatprep.subr.bf16.mxu0 0
    %994 = vmatpush1.bf16.msra.mxu0 0
    %995 = vmatprep.subr.bf16.mxu0 0
    %996 = vmatpush1.bf16.msra.mxu0 0
    %997 = vmatprep.subr.bf16.mxu0 0
    %998 = vmatpush1.bf16.msra.mxu0 0
    %999 = vmatprep.mubr.bf16.mxu0 0
    %1000 = vmatmul.mubr.bf16.gmra.mrb[0].mxu0 %v962
    %v1001 = vpop.f32.mrb[0].mxu0
    %v1002 = vadd.f32 0.0, %v1001
    %v1003 = vpop.f32.mrb[0].mxu0
    %v1004 = vpop.f32.mrb[0].mxu0
    %v1005 = vpop.f32.mrb[0].mxu0
    %1006 = vdwg.mxu0
    %v1007 = vadd.f32 %v959, %v1002
    %v1008 = vmax.f32 %v1007, 0.0
    %v1009 = vld [vmem:[%s0 + $0xd0] sm:$0xff]
    %v1010 = vld [vmem:[%s0 + $0xd8] sm:$0xff]
    %v1011 = vld [vmem:[%s0 + $0xe0] sm:$0xff]
    %v1012 = vld [vmem:[%s0 + $0xe8] sm:$0xff]
    %v1013 = vpack.c.bf16 %v1008, %v1008
    %v1014 = vpack.c.bf16 %v1010, %v1009
    %v1015 = vpack.c.bf16 %v1012, %v1011
    %v1016 = vld [vmem:[%s0 + $0xf0] sm:$0x1]
    %v1017 = vlaneseq
    %v1018 = vshrl.u32 %v1017, 7
    %v1019 = vsub.s32 0, %v1018
    %v1020 = vrot.slane %v1016, %v1019
    %v1022 = vsel %vm412, %v1013, 0
    %1024 = vmatprep.subr.bf16.mxu0 0
    %1025 = vmatpush1.bf16.msra.mxu0 %v1014
    %1026 = vmatprep.subr.bf16.mxu0 0
    %1027 = vmatpush1.bf16.msra.mxu0 %v1015
    %1028 = vmatprep.subr.bf16.mxu0 0
    %1029 = vmatpush1.bf16.msra.mxu0 0
    %1030 = vmatprep.subr.bf16.mxu0 0
    %1031 = vmatpush1.bf16.msra.mxu0 0
    %1032 = vmatprep.subr.bf16.mxu0 0
    %1033 = vmatpush1.bf16.msra.mxu0 0
    %1034 = vmatprep.subr.bf16.mxu0 0
    %1035 = vmatpush1.bf16.msra.mxu0 0
    %1036 = vmatprep.subr.bf16.mxu0 0
    %1037 = vmatpush1.bf16.msra.mxu0 0
    %1038 = vmatprep.subr.bf16.mxu0 0
    %1039 = vmatpush1.bf16.msra.mxu0 0
    %1040 = vmatprep.subr.bf16.mxu0 0
    %1041 = vmatpush1.bf16.msra.mxu0 0
    %1042 = vmatprep.subr.bf16.mxu0 0
    %1043 = vmatpush1.bf16.msra.mxu0 0
    %1044 = vmatprep.subr.bf16.mxu0 0
    %1045 = vmatpush1.bf16.msra.mxu0 0
    %1046 = vmatprep.subr.bf16.mxu0 0
    %1047 = vmatpush1.bf16.msra.mxu0 0
    %1048 = vmatprep.subr.bf16.mxu0 0
    %1049 = vmatpush1.bf16.msra.mxu0 0
    %1050 = vmatprep.subr.bf16.mxu0 0
    %1051 = vmatpush1.bf16.msra.mxu0 0
    %1052 = vmatprep.subr.bf16.mxu0 0
    %1053 = vmatpush1.bf16.msra.mxu0 0
    %1054 = vmatprep.subr.bf16.mxu0 0
    %1055 = vmatpush1.bf16.msra.mxu0 0
    %1056 = vmatprep.mubr.bf16.mxu0 0
    %1057 = vmatmul.mubr.bf16.gmra.mrb[0].mxu0 %v1022
    %v1058 = vpop.f32.mrb[0].mxu0
    %v1059 = vadd.f32 %v1020, %v1058
    %v1060 = vpop.f32.mrb[0].mxu0
    %v1061 = vpop.f32.mrb[0].mxu0
    %v1062 = vpop.f32.mrb[0].mxu0
    %1063 = vdwg.mxu0
    %v1064 = vpack.c.bf16 %v1059, %v1059
    %v1066 = vsel %vm36, %v1064, 0
    %1068 = vmatprep.subr.bf16.mxu0 0
    %1069 = vmatpush1.bf16.msra.mxu0 %v1066
    %1070 = vmatprep.subr.bf16.mxu0 0
    %1071 = vmatpush1.bf16.msra.mxu0 0
    %1072 = vmatprep.subr.bf16.mxu0 0
    %1073 = vmatpush1.bf16.msra.mxu0 0
    %1074 = vmatprep.subr.bf16.mxu0 0
    %1075 = vmatpush1.bf16.msra.mxu0 0
    %1076 = vmatprep.subr.bf16.mxu0 0
    %1077 = vmatpush1.bf16.msra.mxu0 0
    %1078 = vmatprep.subr.bf16.mxu0 0
    %1079 = vmatpush1.bf16.msra.mxu0 0
    %1080 = vmatprep.subr.bf16.mxu0 0
    %1081 = vmatpush1.bf16.msra.mxu0 0
    %1082 = vmatprep.subr.bf16.mxu0 0
    %1083 = vmatpush1.bf16.msra.mxu0 0
    %1084 = vmatprep.subr.bf16.mxu0 0
    %1085 = vmatpush1.bf16.msra.mxu0 0
    %1086 = vmatprep.subr.bf16.mxu0 0
    %1087 = vmatpush1.bf16.msra.mxu0 0
    %1088 = vmatprep.subr.bf16.mxu0 0
    %1089 = vmatpush1.bf16.msra.mxu0 0
    %1090 = vmatprep.subr.bf16.mxu0 0
    %1091 = vmatpush1.bf16.msra.mxu0 0
    %1092 = vmatprep.subr.bf16.mxu0 0
    %1093 = vmatpush1.bf16.msra.mxu0 0
    %1094 = vmatprep.subr.bf16.mxu0 0
    %1095 = vmatpush1.bf16.msra.mxu0 0
    %1096 = vmatprep.subr.bf16.mxu0 0
    %1097 = vmatpush1.bf16.msra.mxu0 0
    %1098 = vmatprep.subr.bf16.mxu0 0
    %1099 = vmatpush1.bf16.msra.mxu0 0
    %1100 = vmatprep.mubr.bf16.mxu0 0
    %1101 = vmatmul.mubr.bf16.gmra.mrb[0].mxu0 %v34
    %v1102 = vpop.f32.mrb[0].mxu0
    %v1103 = vadd.f32 0.0, %v1102
    %v1104 = vpop.f32.mrb[0].mxu0
    %v1105 = vpop.f32.mrb[0].mxu0
    %v1106 = vadd.f32 0.0, %v1105
    %v1107 = vpop.f32.mrb[0].mxu0
    %1108 = vdwg.mxu0
    %1109 = vmatprep.subr.bf16.mxu0 0
    %1110 = vmatpush1.bf16.msra.mxu0 %v811
    %1111 = vmatprep.subr.bf16.mxu0 0
    %1112 = vmatpush1.bf16.msra.mxu0 0
    %1113 = vmatprep.subr.bf16.mxu0 0
    %1114 = vmatpush1.bf16.msra.mxu0 0
    %1115 = vmatprep.subr.bf16.mxu0 0
    %1116 = vmatpush1.bf16.msra.mxu0 0
    %1117 = vmatprep.subr.bf16.mxu0 0
    %1118 = vmatpush1.bf16.msra.mxu0 0
    %1119 = vmatprep.subr.bf16.mxu0 0
    %1120 = vmatpush1.bf16.msra.mxu0 0
    %1121 = vmatprep.subr.bf16.mxu0 0
    %1122 = vmatpush1.bf16.msra.mxu0 0
    %1123 = vmatprep.subr.bf16.mxu0 0
    %1124 = vmatpush1.bf16.msra.mxu0 0
    %1125 = vmatprep.subr.bf16.mxu0 0
    %1126 = vmatpush1.bf16.msra.mxu0 0
    %1127 = vmatprep.subr.bf16.mxu0 0
    %1128 = vmatpush1.bf16.msra.mxu0 0
    %1129 = vmatprep.subr.bf16.mxu0 0
    %1130 = vmatpush1.bf16.msra.mxu0 0
    %1131 = vmatprep.subr.bf16.mxu0 0
    %1132 = vmatpush1.bf16.msra.mxu0 0
    %1133 = vmatprep.subr.bf16.mxu0 0
    %1134 = vmatpush1.bf16.msra.mxu0 0
    %1135 = vmatprep.subr.bf16.mxu0 0
    %1136 = vmatpush1.bf16.msra.mxu0 0
    %1137 = vmatprep.subr.bf16.mxu0 0
    %1138 = vmatpush1.bf16.msra.mxu0 0
    %1139 = vmatprep.subr.bf16.mxu0 0
    %1140 = vmatpush1.bf16.msra.mxu0 0
    %1141 = vmatprep.mubr.bf16.mxu0 0
    %1142 = vmatmul.mubr.bf16.gmra.mrb[0].mxu0 %v85
    %v1143 = vpop.f32.mrb[0].mxu0
    %v1144 = vadd.f32 0.0, %v1143
    %v1145 = vpop.f32.mrb[0].mxu0
    %v1146 = vpop.f32.mrb[0].mxu0
    %v1147 = vadd.f32 0.0, %v1146
    %v1148 = vpop.f32.mrb[0].mxu0
    %1149 = vdwg.mxu0
    %1150 = vmatprep.subr.bf16.mxu0 0
    %1151 = vmatpush1.bf16.msra.mxu0 %v811
    %1152 = vmatprep.subr.bf16.mxu0 0
    %1153 = vmatpush1.bf16.msra.mxu0 0
    %1154 = vmatprep.subr.bf16.mxu0 0
    %1155 = vmatpush1.bf16.msra.mxu0 0
    %1156 = vmatprep.subr.bf16.mxu0 0
    %1157 = vmatpush1.bf16.msra.mxu0 0
    %1158 = vmatprep.subr.bf16.mxu0 0
    %1159 = vmatpush1.bf16.msra.mxu0 0
    %1160 = vmatprep.subr.bf16.mxu0 0
    %1161 = vmatpush1.bf16.msra.mxu0 0
    %1162 = vmatprep.subr.bf16.mxu0 0
    %1163 = vmatpush1.bf16.msra.mxu0 0
    %1164 = vmatprep.subr.bf16.mxu0 0
    %1165 = vmatpush1.bf16.msra.mxu0 0
    %1166 = vmatprep.subr.bf16.mxu0 0
    %1167 = vmatpush1.bf16.msra.mxu0 0
    %1168 = vmatprep.subr.bf16.mxu0 0
    %1169 = vmatpush1.bf16.msra.mxu0 0
    %1170 = vmatprep.subr.bf16.mxu0 0
    %1171 = vmatpush1.bf16.msra.mxu0 0
    %1172 = vmatprep.subr.bf16.mxu0 0
    %1173 = vmatpush1.bf16.msra.mxu0 0
    %1174 = vmatprep.subr.bf16.mxu0 0
    %1175 = vmatpush1.bf16.msra.mxu0 0
    %1176 = vmatprep.subr.bf16.mxu0 0
    %1177 = vmatpush1.bf16.msra.mxu0 0
    %1178 = vmatprep.subr.bf16.mxu0 0
    %1179 = vmatpush1.bf16.msra.mxu0 0
    %1180 = vmatprep.subr.bf16.mxu0 0
    %1181 = vmatpush1.bf16.msra.mxu0 0
    %1182 = vmatprep.mubr.bf16.mxu0 0
    %1183 = vmatmul.mubr.bf16.gmra.mrb[0].mxu0 %v134
    %v1184 = vpop.f32.mrb[0].mxu0
    %v1185 = vadd.f32 0.0, %v1184
    %v1186 = vpop.f32.mrb[0].mxu0
    %v1187 = vpop.f32.mrb[0].mxu0
    %v1188 = vadd.f32 0.0, %v1187
    %v1189 = vpop.f32.mrb[0].mxu0
    %1190 = vdwg.mxu0
    %v1191 = vld [vmem:[%s0 + $0x138] sm:$0x1]
    %v1192 = vld [vmem:[%s0 + $0xf8] sm:$0xff]
    %v1193 = vld [vmem:[%s0 + $0x100] sm:$0xf]
    %v1194 = vpack.c.bf16 %v1193, %v1192
    %v1195 = vsel %vm459, %v458, 0
    %v1198 = vsel %vm463, %v1194, 0
    %1200 = vmatprep.subr.bf16.mxu0 0
    %1201 = vmatpush1.bf16.msra.mxu0 %v1198
    %1202 = vmatprep.subr.bf16.mxu0 0
    %1203 = vmatpush1.bf16.msra.mxu0 0
    %1204 = vmatprep.subr.bf16.mxu0 0
    %1205 = vmatpush1.bf16.msra.mxu0 0
    %1206 = vmatprep.subr.bf16.mxu0 0
    %1207 = vmatpush1.bf16.msra.mxu0 0
    %1208 = vmatprep.subr.bf16.mxu0 0
    %1209 = vmatpush1.bf16.msra.mxu0 0
    %1210 = vmatprep.subr.bf16.mxu0 0
    %1211 = vmatpush1.bf16.msra.mxu0 0
    %1212 = vmatprep.subr.bf16.mxu0 0
    %1213 = vmatpush1.bf16.msra.mxu0 0
    %1214 = vmatprep.subr.bf16.mxu0 0
    %1215 = vmatpush1.bf16.msra.mxu0 0
    %1216 = vmatprep.subr.bf16.mxu0 0
    %1217 = vmatpush1.bf16.msra.mxu0 0
    %1218 = vmatprep.subr.bf16.mxu0 0
    %1219 = vmatpush1.bf16.msra.mxu0 0
    %1220 = vmatprep.subr.bf16.mxu0 0
    %1221 = vmatpush1.bf16.msra.mxu0 0
    %1222 = vmatprep.subr.bf16.mxu0 0
    %1223 = vmatpush1.bf16.msra.mxu0 0
    %1224 = vmatprep.subr.bf16.mxu0 0
    %1225 = vmatpush1.bf16.msra.mxu0 0
    %1226 = vmatprep.subr.bf16.mxu0 0
    %1227 = vmatpush1.bf16.msra.mxu0 0
    %1228 = vmatprep.subr.bf16.mxu0 0
    %1229 = vmatpush1.bf16.msra.mxu0 0
    %1230 = vmatprep.subr.bf16.mxu0 0
    %1231 = vmatpush1.bf16.msra.mxu0 0
    %1232 = vmatprep.mubr.bf16.mxu0 0
    %1233 = vmatmul.mubr.bf16.gmra.mrb[0].mxu0 %v1195
    %v1234 = vpop.f32.mrb[0].mxu0
    %v1235 = vadd.f32 0.0, %v1234
    %v1236 = vpop.f32.mrb[0].mxu0
    %v1237 = vpop.f32.mrb[0].mxu0
    %v1238 = vadd.f32 0.0, %v1237
    %v1239 = vpop.f32.mrb[0].mxu0
    %1240 = vdwg.mxu0
    %v1241 = vlaneseq
    %v1242 = vshrl.u32 %v1241, 7
    %v1243 = vsub.s32 0, %v1242
    %v1244 = vrot.slane %v1191, %v1243
    %v1245 = vadd.f32 %v1244, %v1235
    %v1246 = vadd.f32 %v1244, %v1238
    %v1247 = vld [vmem:[%s0 + $0x108] sm:$0xff]
    %v1248 = vld [vmem:[%s0 + $0x110] sm:$0xf]
    %v1249 = vpack.c.bf16 %v1147, %v1144
    %v1250 = vpack.c.bf16 %v1248, %v1247
    %v1252 = vsel %vm459, %v1249, 0
    %v1255 = vsel %vm463, %v1250, 0
    %1257 = vmatprep.subr.bf16.mxu0 0
    %1258 = vmatpush1.bf16.msra.mxu0 %v1255
    %1259 = vmatprep.subr.bf16.mxu0 0
    %1260 = vmatpush1.bf16.msra.mxu0 0
    %1261 = vmatprep.subr.bf16.mxu0 0
    %1262 = vmatpush1.bf16.msra.mxu0 0
    %1263 = vmatprep.subr.bf16.mxu0 0
    %1264 = vmatpush1.bf16.msra.mxu0 0
    %1265 = vmatprep.subr.bf16.mxu0 0
    %1266 = vmatpush1.bf16.msra.mxu0 0
    %1267 = vmatprep.subr.bf16.mxu0 0
    %1268 = vmatpush1.bf16.msra.mxu0 0
    %1269 = vmatprep.subr.bf16.mxu0 0
    %1270 = vmatpush1.bf16.msra.mxu0 0
    %1271 = vmatprep.subr.bf16.mxu0 0
    %1272 = vmatpush1.bf16.msra.mxu0 0
    %1273 = vmatprep.subr.bf16.mxu0 0
    %1274 = vmatpush1.bf16.msra.mxu0 0
    %1275 = vmatprep.subr.bf16.mxu0 0
    %1276 = vmatpush1.bf16.msra.mxu0 0
    %1277 = vmatprep.subr.bf16.mxu0 0
    %1278 = vmatpush1.bf16.msra.mxu0 0
    %1279 = vmatprep.subr.bf16.mxu0 0
    %1280 = vmatpush1.bf16.msra.mxu0 0
    %1281 = vmatprep.subr.bf16.mxu0 0
    %1282 = vmatpush1.bf16.msra.mxu0 0
    %1283 = vmatprep.subr.bf16.mxu0 0
    %1284 = vmatpush1.bf16.msra.mxu0 0
    %1285 = vmatprep.subr.bf16.mxu0 0
    %1286 = vmatpush1.bf16.msra.mxu0 0
    %1287 = vmatprep.subr.bf16.mxu0 0
    %1288 = vmatpush1.bf16.msra.mxu0 0
    %1289 = vmatprep.mubr.bf16.mxu0 0
    %1290 = vmatmul.mubr.bf16.gmra.mrb[0].mxu0 %v1252
    %v1291 = vpop.f32.mrb[0].mxu0
    %v1292 = vadd.f32 0.0, %v1291
    %v1293 = vpop.f32.mrb[0].mxu0
    %v1294 = vpop.f32.mrb[0].mxu0
    %v1295 = vadd.f32 0.0, %v1294
    %v1296 = vpop.f32.mrb[0].mxu0
    %1297 = vdwg.mxu0
    %v1298 = vadd.f32 %v1245, %v1292
    %v1299 = vadd.f32 %v1246, %v1295
    %v1300 = vld [vmem:[%s0 + $0x118] sm:$0xff]
    %v1301 = vld [vmem:[%s0 + $0x120] sm:$0xf]
    %v1302 = vpack.c.bf16 %v1188, %v1185
    %v1303 = vpack.c.bf16 %v1301, %v1300
    %v1305 = vsel %vm459, %v1302, 0
    %v1308 = vsel %vm463, %v1303, 0
    %1310 = vmatprep.subr.bf16.mxu0 0
    %1311 = vmatpush1.bf16.msra.mxu0 %v1308
    %1312 = vmatprep.subr.bf16.mxu0 0
    %1313 = vmatpush1.bf16.msra.mxu0 0
    %1314 = vmatprep.subr.bf16.mxu0 0
    %1315 = vmatpush1.bf16.msra.mxu0 0
    %1316 = vmatprep.subr.bf16.mxu0 0
    %1317 = vmatpush1.bf16.msra.mxu0 0
    %1318 = vmatprep.subr.bf16.mxu0 0
    %1319 = vmatpush1.bf16.msra.mxu0 0
    %1320 = vmatprep.subr.bf16.mxu0 0
    %1321 = vmatpush1.bf16.msra.mxu0 0
    %1322 = vmatprep.subr.bf16.mxu0 0
    %1323 = vmatpush1.bf16.msra.mxu0 0
    %1324 = vmatprep.subr.bf16.mxu0 0
    %1325 = vmatpush1.bf16.msra.mxu0 0
    %1326 = vmatprep.subr.bf16.mxu0 0
    %1327 = vmatpush1.bf16.msra.mxu0 0
    %1328 = vmatprep.subr.bf16.mxu0 0
    %1329 = vmatpush1.bf16.msra.mxu0 0
    %1330 = vmatprep.subr.bf16.mxu0 0
    %1331 = vmatpush1.bf16.msra.mxu0 0
    %1332 = vmatprep.subr.bf16.mxu0 0
    %1333 = vmatpush1.bf16.msra.mxu0 0
    %1334 = vmatprep.subr.bf16.mxu0 0
    %1335 = vmatpush1.bf16.msra.mxu0 0
    %1336 = vmatprep.subr.bf16.mxu0 0
    %1337 = vmatpush1.bf16.msra.mxu0 0
    %1338 = vmatprep.subr.bf16.mxu0 0
    %1339 = vmatpush1.bf16.msra.mxu0 0
    %1340 = vmatprep.subr.bf16.mxu0 0
    %1341 = vmatpush1.bf16.msra.mxu0 0
    %1342 = vmatprep.mubr.bf16.mxu0 0
    %1343 = vmatmul.mubr.bf16.gmra.mrb[0].mxu0 %v1305
    %v1344 = vpop.f32.mrb[0].mxu0
    %v1345 = vadd.f32 0.0, %v1344
    %v1346 = vpop.f32.mrb[0].mxu0
    %v1347 = vpop.f32.mrb[0].mxu0
    %v1348 = vadd.f32 0.0, %v1347
    %v1349 = vpop.f32.mrb[0].mxu0
    %1350 = vdwg.mxu0
    %v1351 = vadd.f32 %v1298, %v1345
    %v1352 = vadd.f32 %v1299, %v1348
    %v1353 = vld [vmem:[%s0 + $0x128] sm:$0xff]
    %v1354 = vld [vmem:[%s0 + $0x130] sm:$0xf]
    %v1355 = vpack.c.bf16 %v1106, %v1103
    %v1356 = vpack.c.bf16 %v1354, %v1353
    %v1358 = vsel %vm459, %v1355, 0
    %v1361 = vsel %vm463, %v1356, 0
    %1363 = vmatprep.subr.bf16.mxu0 0
    %1364 = vmatpush1.bf16.msra.mxu0 %v1361
    %1365 = vmatprep.subr.bf16.mxu0 0
    %1366 = vmatpush1.bf16.msra.mxu0 0
    %1367 = vmatprep.subr.bf16.mxu0 0
    %1368 = vmatpush1.bf16.msra.mxu0 0
    %1369 = vmatprep.subr.bf16.mxu0 0
    %1370 = vmatpush1.bf16.msra.mxu0 0
    %1371 = vmatprep.subr.bf16.mxu0 0
    %1372 = vmatpush1.bf16.msra.mxu0 0
    %1373 = vmatprep.subr.bf16.mxu0 0
    %1374 = vmatpush1.bf16.msra.mxu0 0
    %1375 = vmatprep.subr.bf16.mxu0 0
    %1376 = vmatpush1.bf16.msra.mxu0 0
    %1377 = vmatprep.subr.bf16.mxu0 0
    %1378 = vmatpush1.bf16.msra.mxu0 0
    %1379 = vmatprep.subr.bf16.mxu0 0
    %1380 = vmatpush1.bf16.msra.mxu0 0
    %1381 = vmatprep.subr.bf16.mxu0 0
    %1382 = vmatpush1.bf16.msra.mxu0 0
    %1383 = vmatprep.subr.bf16.mxu0 0
    %1384 = vmatpush1.bf16.msra.mxu0 0
    %1385 = vmatprep.subr.bf16.mxu0 0
    %1386 = vmatpush1.bf16.msra.mxu0 0
    %1387 = vmatprep.subr.bf16.mxu0 0
    %1388 = vmatpush1.bf16.msra.mxu0 0
    %1389 = vmatprep.subr.bf16.mxu0 0
    %1390 = vmatpush1.bf16.msra.mxu0 0
    %1391 = vmatprep.subr.bf16.mxu0 0
    %1392 = vmatpush1.bf16.msra.mxu0 0
    %1393 = vmatprep.subr.bf16.mxu0 0
    %1394 = vmatpush1.bf16.msra.mxu0 0
    %1395 = vmatprep.mubr.bf16.mxu0 0
    %1396 = vmatmul.mubr.bf16.gmra.mrb[0].mxu0 %v1358
    %v1397 = vpop.f32.mrb[0].mxu0
    %v1398 = vadd.f32 0.0, %v1397
    %v1399 = vpop.f32.mrb[0].mxu0
    %v1400 = vpop.f32.mrb[0].mxu0
    %v1401 = vadd.f32 0.0, %v1400
    %v1402 = vpop.f32.mrb[0].mxu0
    %1403 = vdwg.mxu0
    %v1404 = vadd.f32 %v1351, %v1398
    %v1405 = vadd.f32 %v1352, %v1401
    %v1406 = vmax.f32 %v1404, 0.0
    %v1407 = vmax.f32 %v1405, 0.0
    %v1408 = vld [vmem:[%s0 + $0x140] sm:$0xff]
    %v1409 = vld [vmem:[%s0 + $0x148] sm:$0xff]
    %v1410 = vld [vmem:[%s0 + $0x150] sm:$0xff]
    %v1411 = vld [vmem:[%s0 + $0x158] sm:$0xff]
    %v1412 = vpack.c.bf16 %v1407, %v1406
    %v1413 = vpack.c.bf16 %v1409, %v1408
    %v1414 = vpack.c.bf16 %v1411, %v1410
    %v1415 = vld [vmem:[%s0 + $0x160] sm:$0x1]
    %v1416 = vlaneseq
    %v1417 = vshrl.u32 %v1416, 7
    %v1418 = vsub.s32 0, %v1417
    %v1419 = vrot.slane %v1415, %v1418
    %v1421 = vsel %vm412, %v1412, 0
    %1423 = vmatprep.subr.bf16.mxu0 0
    %1424 = vmatpush1.bf16.msra.mxu0 %v1413
    %1425 = vmatprep.subr.bf16.mxu0 0
    %1426 = vmatpush1.bf16.msra.mxu0 %v1414
    %1427 = vmatprep.subr.bf16.mxu0 0
    %1428 = vmatpush1.bf16.msra.mxu0 0
    %1429 = vmatprep.subr.bf16.mxu0 0
    %1430 = vmatpush1.bf16.msra.mxu0 0
    %1431 = vmatprep.subr.bf16.mxu0 0
    %1432 = vmatpush1.bf16.msra.mxu0 0
    %1433 = vmatprep.subr.bf16.mxu0 0
    %1434 = vmatpush1.bf16.msra.mxu0 0
    %1435 = vmatprep.subr.bf16.mxu0 0
    %1436 = vmatpush1.bf16.msra.mxu0 0
    %1437 = vmatprep.subr.bf16.mxu0 0
    %1438 = vmatpush1.bf16.msra.mxu0 0
    %1439 = vmatprep.subr.bf16.mxu0 0
    %1440 = vmatpush1.bf16.msra.mxu0 0
    %1441 = vmatprep.subr.bf16.mxu0 0
    %1442 = vmatpush1.bf16.msra.mxu0 0
    %1443 = vmatprep.subr.bf16.mxu0 0
    %1444 = vmatpush1.bf16.msra.mxu0 0
    %1445 = vmatprep.subr.bf16.mxu0 0
    %1446 = vmatpush1.bf16.msra.mxu0 0
    %1447 = vmatprep.subr.bf16.mxu0 0
    %1448 = vmatpush1.bf16.msra.mxu0 0
    %1449 = vmatprep.subr.bf16.mxu0 0
    %1450 = vmatpush1.bf16.msra.mxu0 0
    %1451 = vmatprep.subr.bf16.mxu0 0
    %1452 = vmatpush1.bf16.msra.mxu0 0
    %1453 = vmatprep.subr.bf16.mxu0 0
    %1454 = vmatpush1.bf16.msra.mxu0 0
    %1455 = vmatprep.mubr.bf16.mxu0 0
    %1456 = vmatmul.mubr.bf16.gmra.mrb[0].mxu0 %v1421
    %v1457 = vpop.f32.mrb[0].mxu0
    %v1458 = vadd.f32 %v1419, %v1457
    %v1459 = vpop.f32.mrb[0].mxu0
    %v1460 = vpop.f32.mrb[0].mxu0
    %v1461 = vadd.f32 %v1419, %v1460
    %v1462 = vpop.f32.mrb[0].mxu0
    %1463 = vdwg.mxu0
    %v1464 = vpack.c.bf16 %v1461, %v1458
    %v1466 = vsel %vm463, %v1464, 0
    %1468 = vmatprep.subr.bf16.mxu0 0
    %1469 = vmatpush1.bf16.msra.mxu0 %v1466
    %1470 = vmatprep.subr.bf16.mxu0 0
    %1471 = vmatpush1.bf16.msra.mxu0 0
    %1472 = vmatprep.subr.bf16.mxu0 0
    %1473 = vmatpush1.bf16.msra.mxu0 0
    %1474 = vmatprep.subr.bf16.mxu0 0
    %1475 = vmatpush1.bf16.msra.mxu0 0
    %1476 = vmatprep.subr.bf16.mxu0 0
    %1477 = vmatpush1.bf16.msra.mxu0 0
    %1478 = vmatprep.subr.bf16.mxu0 0
    %1479 = vmatpush1.bf16.msra.mxu0 0
    %1480 = vmatprep.subr.bf16.mxu0 0
    %1481 = vmatpush1.bf16.msra.mxu0 0
    %1482 = vmatprep.subr.bf16.mxu0 0
    %1483 = vmatpush1.bf16.msra.mxu0 0
    %1484 = vmatprep.subr.bf16.mxu0 0
    %1485 = vmatpush1.bf16.msra.mxu0 0
    %1486 = vmatprep.subr.bf16.mxu0 0
    %1487 = vmatpush1.bf16.msra.mxu0 0
    %1488 = vmatprep.subr.bf16.mxu0 0
    %1489 = vmatpush1.bf16.msra.mxu0 0
    %1490 = vmatprep.subr.bf16.mxu0 0
    %1491 = vmatpush1.bf16.msra.mxu0 0
    %1492 = vmatprep.subr.bf16.mxu0 0
    %1493 = vmatpush1.bf16.msra.mxu0 0
    %1494 = vmatprep.subr.bf16.mxu0 0
    %1495 = vmatpush1.bf16.msra.mxu0 0
    %1496 = vmatprep.subr.bf16.mxu0 0
    %1497 = vmatpush1.bf16.msra.mxu0 0
    %1498 = vmatprep.subr.bf16.mxu0 0
    %1499 = vmatpush1.bf16.msra.mxu0 0
    %1500 = vmatprep.mubr.bf16.mxu0 0
    %1501 = vmatmul.mubr.bf16.gmra.mrb[0].mxu0 %v461
    %v1502 = vpop.f32.mrb[0].mxu0
    %v1503 = vadd.f32 0.0, %v1502
    %v1504 = vpop.f32.mrb[0].mxu0
    %v1505 = vpop.f32.mrb[0].mxu0
    %v1506 = vpop.f32.mrb[0].mxu0
    %1507 = vdwg.mxu0
    %1508 = vmatprep.subr.bf16.mxu0 0
    %1509 = vmatpush1.bf16.msra.mxu0 %v1066
    %1510 = vmatprep.subr.bf16.mxu0 0
    %1511 = vmatpush1.bf16.msra.mxu0 0
    %1512 = vmatprep.subr.bf16.mxu0 0
    %1513 = vmatpush1.bf16.msra.mxu0 0
    %1514 = vmatprep.subr.bf16.mxu0 0
    %1515 = vmatpush1.bf16.msra.mxu0 0
    %1516 = vmatprep.subr.bf16.mxu0 0
    %1517 = vmatpush1.bf16.msra.mxu0 0
    %1518 = vmatprep.subr.bf16.mxu0 0
    %1519 = vmatpush1.bf16.msra.mxu0 0
    %1520 = vmatprep.subr.bf16.mxu0 0
    %1521 = vmatpush1.bf16.msra.mxu0 0
    %1522 = vmatprep.subr.bf16.mxu0 0
    %1523 = vmatpush1.bf16.msra.mxu0 0
    %1524 = vmatprep.subr.bf16.mxu0 0
    %1525 = vmatpush1.bf16.msra.mxu0 0
    %1526 = vmatprep.subr.bf16.mxu0 0
    %1527 = vmatpush1.bf16.msra.mxu0 0
    %1528 = vmatprep.subr.bf16.mxu0 0
    %1529 = vmatpush1.bf16.msra.mxu0 0
    %1530 = vmatprep.subr.bf16.mxu0 0
    %1531 = vmatpush1.bf16.msra.mxu0 0
    %1532 = vmatprep.subr.bf16.mxu0 0
    %1533 = vmatpush1.bf16.msra.mxu0 0
    %1534 = vmatprep.subr.bf16.mxu0 0
    %1535 = vmatpush1.bf16.msra.mxu0 0
    %1536 = vmatprep.subr.bf16.mxu0 0
    %1537 = vmatpush1.bf16.msra.mxu0 0
    %1538 = vmatprep.subr.bf16.mxu0 0
    %1539 = vmatpush1.bf16.msra.mxu0 0
    %1540 = vmatprep.mubr.bf16.mxu0 0
    %1541 = vmatmul.mubr.bf16.gmra.mrb[0].mxu0 %v509
    %v1542 = vpop.f32.mrb[0].mxu0
    %v1543 = vadd.f32 0.0, %v1542
    %v1544 = vpop.f32.mrb[0].mxu0
    %v1545 = vpop.f32.mrb[0].mxu0
    %v1546 = vpop.f32.mrb[0].mxu0
    %1547 = vdwg.mxu0
    %v1548 = vld [vmem:[%s0 + $0x198] sm:$0x1]
    %v1549 = vld [vmem:[%s0 + $0x168] sm:$0xff]
    %v1550 = vld [vmem:[%s0 + $0x170] sm:$0xf]
    %v1551 = vpack.c.bf16 %v1550, %v1549
    %v1552 = vsel %vm459, %v806, 0
    %v1555 = vsel %vm463, %v1551, 0
    %1557 = vmatprep.subr.bf16.mxu0 0
    %1558 = vmatpush1.bf16.msra.mxu0 %v1555
    %1559 = vmatprep.subr.bf16.mxu0 0
    %1560 = vmatpush1.bf16.msra.mxu0 0
    %1561 = vmatprep.subr.bf16.mxu0 0
    %1562 = vmatpush1.bf16.msra.mxu0 0
    %1563 = vmatprep.subr.bf16.mxu0 0
    %1564 = vmatpush1.bf16.msra.mxu0 0
    %1565 = vmatprep.subr.bf16.mxu0 0
    %1566 = vmatpush1.bf16.msra.mxu0 0
    %1567 = vmatprep.subr.bf16.mxu0 0
    %1568 = vmatpush1.bf16.msra.mxu0 0
    %1569 = vmatprep.subr.bf16.mxu0 0
    %1570 = vmatpush1.bf16.msra.mxu0 0
    %1571 = vmatprep.subr.bf16.mxu0 0
    %1572 = vmatpush1.bf16.msra.mxu0 0
    %1573 = vmatprep.subr.bf16.mxu0 0
    %1574 = vmatpush1.bf16.msra.mxu0 0
    %1575 = vmatprep.subr.bf16.mxu0 0
    %1576 = vmatpush1.bf16.msra.mxu0 0
    %1577 = vmatprep.subr.bf16.mxu0 0
    %1578 = vmatpush1.bf16.msra.mxu0 0
    %1579 = vmatprep.subr.bf16.mxu0 0
    %1580 = vmatpush1.bf16.msra.mxu0 0
    %1581 = vmatprep.subr.bf16.mxu0 0
    %1582 = vmatpush1.bf16.msra.mxu0 0
    %1583 = vmatprep.subr.bf16.mxu0 0
    %1584 = vmatpush1.bf16.msra.mxu0 0
    %1585 = vmatprep.subr.bf16.mxu0 0
    %1586 = vmatpush1.bf16.msra.mxu0 0
    %1587 = vmatprep.subr.bf16.mxu0 0
    %1588 = vmatpush1.bf16.msra.mxu0 0
    %1589 = vmatprep.mubr.bf16.mxu0 0
    %1590 = vmatmul.mubr.bf16.gmra.mrb[0].mxu0 %v1552
    %v1591 = vpop.f32.mrb[0].mxu0
    %v1592 = vadd.f32 0.0, %v1591
    %v1593 = vpop.f32.mrb[0].mxu0
    %v1594 = vpop.f32.mrb[0].mxu0
    %v1595 = vpop.f32.mrb[0].mxu0
    %1596 = vdwg.mxu0
    %v1597 = vlaneseq
    %v1598 = vshrl.u32 %v1597, 7
    %v1599 = vsub.s32 0, %v1598
    %v1600 = vrot.slane %v1548, %v1599
    %v1601 = vadd.f32 %v1600, %v1592
    %v1602 = vld [vmem:[%s0 + $0x178] sm:$0xff]
    %v1603 = vld [vmem:[%s0 + $0x180] sm:$0x3]
    %v1604 = vpack.c.bf16 %v1503, %v1503
    %v1605 = vpack.c.bf16 %v1603, %v1602
    %vm1606 = vcmask 80896
    %v1608 = vsel %vm1606, %v1604, 0
    %vm1610 = vcmask 1044480
    %v1612 = vsel %vm1610, %v1605, 0
    %1614 = vmatprep.subr.bf16.mxu0 0
    %1615 = vmatpush1.bf16.msra.mxu0 %v1612
    %1616 = vmatprep.subr.bf16.mxu0 0
    %1617 = vmatpush1.bf16.msra.mxu0 0
    %1618 = vmatprep.subr.bf16.mxu0 0
    %1619 = vmatpush1.bf16.msra.mxu0 0
    %1620 = vmatprep.subr.bf16.mxu0 0
    %1621 = vmatpush1.bf16.msra.mxu0 0
    %1622 = vmatprep.subr.bf16.mxu0 0
    %1623 = vmatpush1.bf16.msra.mxu0 0
    %1624 = vmatprep.subr.bf16.mxu0 0
    %1625 = vmatpush1.bf16.msra.mxu0 0
    %1626 = vmatprep.subr.bf16.mxu0 0
    %1627 = vmatpush1.bf16.msra.mxu0 0
    %1628 = vmatprep.subr.bf16.mxu0 0
    %1629 = vmatpush1.bf16.msra.mxu0 0
    %1630 = vmatprep.subr.bf16.mxu0 0
    %1631 = vmatpush1.bf16.msra.mxu0 0
    %1632 = vmatprep.subr.bf16.mxu0 0
    %1633 = vmatpush1.bf16.msra.mxu0 0
    %1634 = vmatprep.subr.bf16.mxu0 0
    %1635 = vmatpush1.bf16.msra.mxu0 0
    %1636 = vmatprep.subr.bf16.mxu0 0
    %1637 = vmatpush1.bf16.msra.mxu0 0
    %1638 = vmatprep.subr.bf16.mxu0 0
    %1639 = vmatpush1.bf16.msra.mxu0 0
    %1640 = vmatprep.subr.bf16.mxu0 0
    %1641 = vmatpush1.bf16.msra.mxu0 0
    %1642 = vmatprep.subr.bf16.mxu0 0
    %1643 = vmatpush1.bf16.msra.mxu0 0
    %1644 = vmatprep.subr.bf16.mxu0 0
    %1645 = vmatpush1.bf16.msra.mxu0 0
    %1646 = vmatprep.mubr.bf16.mxu0 0
    %1647 = vmatmul.mubr.bf16.gmra.mrb[0].mxu0 %v1608
    %v1648 = vpop.f32.mrb[0].mxu0
    %v1649 = vadd.f32 0.0, %v1648
    %v1650 = vpop.f32.mrb[0].mxu0
    %v1651 = vpop.f32.mrb[0].mxu0
    %v1652 = vpop.f32.mrb[0].mxu0
    %1653 = vdwg.mxu0
    %v1654 = vadd.f32 %v1601, %v1649
    %v1655 = vld [vmem:[%s0 + $0x188] sm:$0xff]
    %v1656 = vld [vmem:[%s0 + $0x190] sm:$0xf]
    %v1657 = vpack.c.bf16 %v1543, %v1543
    %v1658 = vpack.c.bf16 %v1656, %v1655
    %v1660 = vsel %vm459, %v1657, 0
    %v1663 = vsel %vm463, %v1658, 0
    %1665 = vmatprep.subr.bf16.mxu0 0
    %1666 = vmatpush1.bf16.msra.mxu0 %v1663
    %1667 = vmatprep.subr.bf16.mxu0 0
    %1668 = vmatpush1.bf16.msra.mxu0 0
    %1669 = vmatprep.subr.bf16.mxu0 0
    %1670 = vmatpush1.bf16.msra.mxu0 0
    %1671 = vmatprep.subr.bf16.mxu0 0
    %1672 = vmatpush1.bf16.msra.mxu0 0
    %1673 = vmatprep.subr.bf16.mxu0 0
    %1674 = vmatpush1.bf16.msra.mxu0 0
    %1675 = vmatprep.subr.bf16.mxu0 0
    %1676 = vmatpush1.bf16.msra.mxu0 0
    %1677 = vmatprep.subr.bf16.mxu0 0
    %1678 = vmatpush1.bf16.msra.mxu0 0
    %1679 = vmatprep.subr.bf16.mxu0 0
    %1680 = vmatpush1.bf16.msra.mxu0 0
    %1681 = vmatprep.subr.bf16.mxu0 0
    %1682 = vmatpush1.bf16.msra.mxu0 0
    %1683 = vmatprep.subr.bf16.mxu0 0
    %1684 = vmatpush1.bf16.msra.mxu0 0
    %1685 = vmatprep.subr.bf16.mxu0 0
    %1686 = vmatpush1.bf16.msra.mxu0 0
    %1687 = vmatprep.subr.bf16.mxu0 0
    %1688 = vmatpush1.bf16.msra.mxu0 0
    %1689 = vmatprep.subr.bf16.mxu0 0
    %1690 = vmatpush1.bf16.msra.mxu0 0
    %1691 = vmatprep.subr.bf16.mxu0 0
    %1692 = vmatpush1.bf16.msra.mxu0 0
    %1693 = vmatprep.subr.bf16.mxu0 0
    %1694 = vmatpush1.bf16.msra.mxu0 0
    %1695 = vmatprep.subr.bf16.mxu0 0
    %1696 = vmatpush1.bf16.msra.mxu0 0
    %1697 = vmatprep.mubr.bf16.mxu0 0
    %1698 = vmatmul.mubr.bf16.gmra.mrb[0].mxu0 %v1660
    %v1699 = vpop.f32.mrb[0].mxu0
    %v1700 = vadd.f32 0.0, %v1699
    %v1701 = vpop.f32.mrb[0].mxu0
    %v1702 = vpop.f32.mrb[0].mxu0
    %v1703 = vpop.f32.mrb[0].mxu0
    %1704 = vdwg.mxu0
    %v1705 = vadd.f32 %v1654, %v1700
    %v1706 = vmax.f32 %v1705, 0.0
    %v1707 = vld [vmem:[%s0 + $0x1a0] sm:$0xff]
    %v1708 = vld [vmem:[%s0 + $0x1a8] sm:$0xff]
    %v1709 = vld [vmem:[%s0 + $0x1b0] sm:$0xff]
    %v1710 = vld [vmem:[%s0 + $0x1b8] sm:$0xff]
    %v1711 = vpack.c.bf16 %v1706, %v1706
    %v1712 = vpack.c.bf16 %v1708, %v1707
    %v1713 = vpack.c.bf16 %v1710, %v1709
    %v1714 = vld [vmem:[%s0 + $0x1c0] sm:$0x1]
    %v1715 = vlaneseq
    %v1716 = vshrl.u32 %v1715, 7
    %v1717 = vsub.s32 0, %v1716
    %v1718 = vrot.slane %v1714, %v1717
    %v1720 = vsel %vm412, %v1711, 0
    %1722 = vmatprep.subr.bf16.mxu0 0
    %1723 = vmatpush1.bf16.msra.mxu0 %v1712
    %1724 = vmatprep.subr.bf16.mxu0 0
    %1725 = vmatpush1.bf16.msra.mxu0 %v1713
    %1726 = vmatprep.subr.bf16.mxu0 0
    %1727 = vmatpush1.bf16.msra.mxu0 0
    %1728 = vmatprep.subr.bf16.mxu0 0
    %1729 = vmatpush1.bf16.msra.mxu0 0
    %1730 = vmatprep.subr.bf16.mxu0 0
    %1731 = vmatpush1.bf16.msra.mxu0 0
    %1732 = vmatprep.subr.bf16.mxu0 0
    %1733 = vmatpush1.bf16.msra.mxu0 0
    %1734 = vmatprep.subr.bf16.mxu0 0
    %1735 = vmatpush1.bf16.msra.mxu0 0
    %1736 = vmatprep.subr.bf16.mxu0 0
    %1737 = vmatpush1.bf16.msra.mxu0 0
    %1738 = vmatprep.subr.bf16.mxu0 0
    %1739 = vmatpush1.bf16.msra.mxu0 0
    %1740 = vmatprep.subr.bf16.mxu0 0
    %1741 = vmatpush1.bf16.msra.mxu0 0
    %1742 = vmatprep.subr.bf16.mxu0 0
    %1743 = vmatpush1.bf16.msra.mxu0 0
    %1744 = vmatprep.subr.bf16.mxu0 0
    %1745 = vmatpush1.bf16.msra.mxu0 0
    %1746 = vmatprep.subr.bf16.mxu0 0
    %1747 = vmatpush1.bf16.msra.mxu0 0
    %1748 = vmatprep.subr.bf16.mxu0 0
    %1749 = vmatpush1.bf16.msra.mxu0 0
    %1750 = vmatprep.subr.bf16.mxu0 0
    %1751 = vmatpush1.bf16.msra.mxu0 0
    %1752 = vmatprep.subr.bf16.mxu0 0
    %1753 = vmatpush1.bf16.msra.mxu0 0
    %1754 = vmatprep.mubr.bf16.mxu0 0
    %1755 = vmatmul.mubr.bf16.gmra.mrb[0].mxu0 %v1720
    %v1756 = vpop.f32.mrb[0].mxu0
    %v1757 = vadd.f32 %v1718, %v1756
    %v1758 = vpop.f32.mrb[0].mxu0
    %v1759 = vpop.f32.mrb[0].mxu0
    %v1760 = vpop.f32.mrb[0].mxu0
    %1761 = vdwg.mxu0
    %v1762 = vld [vmem:[%s0 + $0x1c8] sm:$0xff]
    %v1763 = vld [vmem:[%s0 + $0x1d0] sm:$0x3]
    %v1764 = vpack.c.bf16 %v1757, %v1757
    %v1765 = vpack.c.bf16 %v1763, %v1762
    %v1766 = vld [vmem:[%s0 + $0x1d8] sm:$0x1]
    %v1767 = vlaneseq
    %v1768 = vshrl.u32 %v1767, 7
    %v1769 = vsub.s32 0, %v1768
    %v1770 = vrot.slane %v1766, %v1769
    %v1772 = vsel %vm1606, %v1764, 0
    %v1775 = vsel %vm1610, %v1765, 0
    %1777 = vmatprep.subr.bf16.mxu0 0
    %1778 = vmatpush1.bf16.msra.mxu0 %v1775
    %1779 = vmatprep.subr.bf16.mxu0 0
    %1780 = vmatpush1.bf16.msra.mxu0 0
    %1781 = vmatprep.subr.bf16.mxu0 0
    %1782 = vmatpush1.bf16.msra.mxu0 0
    %1783 = vmatprep.subr.bf16.mxu0 0
    %1784 = vmatpush1.bf16.msra.mxu0 0
    %1785 = vmatprep.subr.bf16.mxu0 0
    %1786 = vmatpush1.bf16.msra.mxu0 0
    %1787 = vmatprep.subr.bf16.mxu0 0
    %1788 = vmatpush1.bf16.msra.mxu0 0
    %1789 = vmatprep.subr.bf16.mxu0 0
    %1790 = vmatpush1.bf16.msra.mxu0 0
    %1791 = vmatprep.subr.bf16.mxu0 0
    %1792 = vmatpush1.bf16.msra.mxu0 0
    %1793 = vmatprep.subr.bf16.mxu0 0
    %1794 = vmatpush1.bf16.msra.mxu0 0
    %1795 = vmatprep.subr.bf16.mxu0 0
    %1796 = vmatpush1.bf16.msra.mxu0 0
    %1797 = vmatprep.subr.bf16.mxu0 0
    %1798 = vmatpush1.bf16.msra.mxu0 0
    %1799 = vmatprep.subr.bf16.mxu0 0
    %1800 = vmatpush1.bf16.msra.mxu0 0
    %1801 = vmatprep.subr.bf16.mxu0 0
    %1802 = vmatpush1.bf16.msra.mxu0 0
    %1803 = vmatprep.subr.bf16.mxu0 0
    %1804 = vmatpush1.bf16.msra.mxu0 0
    %1805 = vmatprep.subr.bf16.mxu0 0
    %1806 = vmatpush1.bf16.msra.mxu0 0
    %1807 = vmatprep.subr.bf16.mxu0 0
    %1808 = vmatpush1.bf16.msra.mxu0 0
    %1809 = vmatprep.mubr.bf16.mxu0 0
    %1810 = vmatmul.mubr.bf16.gmra.mrb[0].mxu0 %v1772
    %v1811 = vpop.f32.mrb[0].mxu0
    %v1812 = vadd.f32 %v1770, %v1811
    %v1813 = vpop.f32.mrb[0].mxu0
    %v1814 = vpop.f32.mrb[0].mxu0
    %v1815 = vpop.f32.mrb[0].mxu0
    %1816 = vdwg.mxu0
    %v1817 = vmax.f32 %v1812, 0.0
    %v1818 = vld [vmem:[%s0 + $0x1e0] sm:$0xff]
    %v1819 = vld [vmem:[%s0 + $0x1e8] sm:$0xff]
    %v1820 = vld [vmem:[%s0 + $0x1f0] sm:$0xff]
    %v1821 = vpack.c.bf16 %v1817, %v1817
    %v1822 = vpack.c.bf16 %v1819, %v1818
    %v1823 = vpack.c.bf16 %v1820, %v1820
    %v1824 = vld [vmem:[%s0 + $0x1f8] sm:$0x1]
    %v1825 = vlaneseq
    %v1826 = vshrl.u32 %v1825, 7
    %v1827 = vsub.s32 0, %v1826
    %v1828 = vrot.slane %v1824, %v1827
    %vm1829 = vcmask 195584
    %v1831 = vsel %vm1829, %v1821, 0
    %v1834 = vsel %vm349, %v1823, 0
    %1836 = vmatprep.subr.bf16.mxu0 0
    %1837 = vmatpush1.bf16.msra.mxu0 %v1822
    %1838 = vmatprep.subr.bf16.mxu0 0
    %1839 = vmatpush1.bf16.msra.mxu0 %v1834
    %1840 = vmatprep.subr.bf16.mxu0 0
    %1841 = vmatpush1.bf16.msra.mxu0 0
    %1842 = vmatprep.subr.bf16.mxu0 0
    %1843 = vmatpush1.bf16.msra.mxu0 0
    %1844 = vmatprep.subr.bf16.mxu0 0
    %1845 = vmatpush1.bf16.msra.mxu0 0
    %1846 = vmatprep.subr.bf16.mxu0 0
    %1847 = vmatpush1.bf16.msra.mxu0 0
    %1848 = vmatprep.subr.bf16.mxu0 0
    %1849 = vmatpush1.bf16.msra.mxu0 0
    %1850 = vmatprep.subr.bf16.mxu0 0
    %1851 = vmatpush1.bf16.msra.mxu0 0
    %1852 = vmatprep.subr.bf16.mxu0 0
    %1853 = vmatpush1.bf16.msra.mxu0 0
    %1854 = vmatprep.subr.bf16.mxu0 0
    %1855 = vmatpush1.bf16.msra.mxu0 0
    %1856 = vmatprep.subr.bf16.mxu0 0
    %1857 = vmatpush1.bf16.msra.mxu0 0
    %1858 = vmatprep.subr.bf16.mxu0 0
    %1859 = vmatpush1.bf16.msra.mxu0 0
    %1860 = vmatprep.subr.bf16.mxu0 0
    %1861 = vmatpush1.bf16.msra.mxu0 0
    %1862 = vmatprep.subr.bf16.mxu0 0
    %1863 = vmatpush1.bf16.msra.mxu0 0
    %1864 = vmatprep.subr.bf16.mxu0 0
    %1865 = vmatpush1.bf16.msra.mxu0 0
    %1866 = vmatprep.subr.bf16.mxu0 0
    %1867 = vmatpush1.bf16.msra.mxu0 0
    %1868 = vmatprep.mubr.bf16.mxu0 0
    %1869 = vmatmul.mubr.bf16.gmra.mrb[0].mxu0 %v1831
    %v1870 = vpop.f32.mrb[0].mxu0
    %v1871 = vadd.f32 %v1828, %v1870
    %v1872 = vpop.f32.mrb[0].mxu0
    %v1873 = vpop.f32.mrb[0].mxu0
    %v1874 = vpop.f32.mrb[0].mxu0
    %1875 = vdwg.mxu0
    %vm1876 = vcmask 37888
    %1877 = vst.msk [vmem:[#allocation2] sm:$0x3f] %vm1876, %v1871
    // Predicated region
    $region14: #{tpu_custom_call.1} parent=1 // pred_check
      _
    $region15: #{tpu_custom_call.1} parent=1 // pred_check_branch
      %1879 = sbr.rel (0) target = $region17
    $region16: #{tpu_custom_call.1} parent=1 // pred_region
      %s1881 = ssub.s32 128, 128
      %1882 = vsyncadd [#allocation3], %s1881
      %s1884 = sshll.u32 [#allocation2], 4
      %s1885 = int_to_ptr.vmem [resolvable:$true] %s1884
      %1887 = dma.vmem_to_hbm [thread:$0]  %s1885, 128, %s3, [#allocation3]
    $region17: #{tpu_custom_call.1} parent=1 // pred_fallthru
      _
    // Predicated region
    $region18: #{tpu_custom_call.1} parent=1 // pred_check
      _
    $region19: #{tpu_custom_call.1} parent=1 // pred_check_branch
      %1889 = sbr.rel (0) target = $region21
    $region20: #{tpu_custom_call.1} parent=1 // pred_region
      %1890 = dma.done [#allocation3], 128
    $region21: #{tpu_custom_call.1} parent=1 // pred_fallthru
      _
    %1891 = vsyncpa [#allocation3], 1

</llo_original>
